<compile_context>
chip_gen: v7x
topology: tpu7x:2x2x1
jax: 0.10.0
libtpu: 0.0.40
codegen_flags: <defaults>
</compile_context>

<pallas_src>
import functools

import jax
import jax.numpy as jnp
from jax.experimental import pallas as pl
from jax.experimental.pallas import tpu as pltpu


def _round_up(x, m):
    return (x + m - 1) // m * m


def _nhn_kernel(xa_ref, xb_ref, wg_ref, c_ref, o_ref, xcol_ref, *,
                C_out, C_pad, K, Wp, HpWp, M, BASE0, TILE_L, eps):
    """One (batch, spatial-tile) grid step.

    xa_ref, xb_ref : (C_pad, TILE_L)      two adjacent flat-spatial blocks of the padded slab
                                          -> static halo window of width 2*TILE_L
    wg_ref         : (C_out+1, K^3*C_pad) gamma-scaled conv weights (im2col layout);
                                          last row = all-ones "window" (gives sx via the MXU)
    c_ref          : (R, TILE_L)          packed per-voxel constants:
                                          row 0 = 1/(C_in*voxels), row 1 = Bessel factor,
                                          rows 8..8+C_out-1      = gamma kernel sum,
                                          rows 8+C_out..8+2C_out-1 = beta kernel sum + bias
    o_ref          : (C_out, TILE_L)
    xcol_ref       : (K^3*C_pad, TILE_L)  VMEM scratch holding the im2col matrix
    """
    # Static halo window for this tile (concat along lanes: both halves are 128-multiples).
    xw = jnp.concatenate([xa_ref[...], xb_ref[...]], axis=1)        # (C_pad, 2*TILE_L) f32

    # ---- im2col: one full-sublane-tile, lane-shifted copy of the slab per kernel tap ----
    ki = 0
    for kd in range(K):
        for kh in range(K):
            for kw in range(K):
                s = BASE0 + kd * HpWp + kh * Wp + kw
                xcol_ref[ki * C_pad:(ki + 1) * C_pad, :] = (
                    xw[:, s:s + TILE_L].astype(xcol_ref.dtype))
                ki += 1

    # ---- single fused MXU contraction; row C_out of the product is
    #      sx = sum over window and channels of x (from the appended ones row) ----
    prod = jnp.dot(wg_ref[...], xcol_ref[...],
                   preferred_element_type=jnp.float32)               # (C_out+1, TILE_L)
    conv = prod[0:C_out, :]
    sx = prod[C_out:C_out + 1, :]

    # ---- sum over window+channels of x^2: one channel reduce + separable 3-tap box sums ----
    xs = xw[:, BASE0:BASE0 + TILE_L + 2 * M]
    s2 = jnp.sum(xs * xs, axis=0, keepdims=True)                     # (1, TILE_L + 2M) f32
    for step in (1, Wp, HpWp):
        width = s2.shape[-1] - (K - 1) * step
        acc = s2[:, 0:width]
        for tap in range(1, K):
            acc = acc + s2[:, tap * step:tap * step + width]
        s2 = acc
    sxx = s2                                                         # (1, TILE_L)

    inv_vox = c_ref[0:1, :]
    ibes = c_ref[1:2, :]
    g = c_ref[8:8 + C_out, :]
    bb = c_ref[8 + C_out:8 + 2 * C_out, :]

    means = sx * inv_vox
    var = jnp.maximum(sxx * inv_vox - means * means, 0.0)
    inv_std = jax.lax.rsqrt(var + eps) * ibes                        # EUP rsqrt, Bessel folded
    o_ref[...] = (conv - g * means) * inv_std + bb


def nhn_conv3d(x, weight, gamma, beta, bias, *, eps=1e-5, tile_l=512,
               matmul_dtype=jnp.float32):
    """x: (B, D, H, W, C_in) f32; weight: (K, K, K, C_in, C_out) f32."""
    B, D, H, W, C_in = x.shape
    K = weight.shape[0]
    C_out = weight.shape[-1]
    P = K // 2
    KV = K * K * K

    # Per-tap row-block size = one full sublane group of the matmul dtype (8 f32 / 16 bf16),
    # so every im2col store is tile-aligned and unmasked (perf review item #1).
    sub = 8 * (4 // jnp.dtype(matmul_dtype).itemsize)
    C_pad = _round_up(C_in, sub)

    Dp, Hp, Wp = D + 2 * P, H + 2 * P, W + 2 * P
    HpWp = Hp * Wp
    Lp = Dp * HpWp                                # flat padded spatial size
    M = P * (HpWp + Wp + 1)                       # max |flat offset| of a kernel tap
    front_slabs = -(-M // HpWp)                   # whole extra depth slabs in front
    F = front_slabs * HpWp                        # flat index of padded-grid voxel 0
    BASE0 = F - M                                 # flat index of voxel 0's first tap

    # Spatial tile (lanes).  The static two-block halo requires tile_l >= BASE0 + 2*M.
    tile_l = _round_up(max(tile_l, BASE0 + 2 * M, 128), 128)
    L = _round_up(Lp, tile_l)
    nt = L // tile_l

    # Back padding: the kernel's t+1 halo block reaches flat index (nt+1)*tile_l.
    back_slabs = -(-((nt + 1) * tile_l - F - Lp) // HpWp)
    T = F + Lp + back_slabs * HpWp

    # ---- single relayout pass: transpose + ONE pad (channels, flat margin, spatial) ----
    x_t = jnp.transpose(x, (0, 4, 1, 2, 3))
    x_p = jnp.pad(x_t, ((0, 0), (0, C_pad - C_in),
                        (P + front_slabs, P + back_slabs), (P, P), (P, P)))
    x_ext = x_p.reshape(B, C_pad, T)

    # ---- im2col conv weights (C_out+1, KV*C_pad); last row = the "window" of ones ----
    w_flat = weight.reshape(KV, C_in, C_out)
    wg = jnp.pad(gamma[None, :, None] * w_flat, ((0, 0), (0, C_pad - C_in), (0, 0)))
    wg_mat = wg.reshape(KV * C_pad, C_out).T
    window_row = jnp.pad(jnp.ones((KV, C_in), jnp.float32),
                         ((0, 0), (0, C_pad - C_in))).reshape(1, KV * C_pad)
    wg_aug = jnp.concatenate([wg_mat, window_row], axis=0).astype(matmul_dtype)

    # ---- data-independent geometry from separable per-axis in-bounds masks ----
    def axis_mask(n_pad, n):
        src = jnp.arange(n_pad)[:, None] + jnp.arange(K)[None, :] - 2 * P
        return ((src >= 0) & (src < n)).astype(jnp.float32)          # (n_pad, K)

    md, mh, mw = axis_mask(Dp, D), axis_mask(Hp, H), axis_mask(Wp, W)
    cnt = (md.sum(1)[:, None, None] * mh.sum(1)[None, :, None]
           * mw.sum(1)[None, None, :])                               # (Dp,Hp,Wp) >= 1
    gvec3 = jnp.einsum('kio,i->ko', w_flat, gamma).reshape(K, K, K, C_out)
    bvec3 = jnp.einsum('kio,i->ko', w_flat, beta).reshape(K, K, K, C_out)
    gsum = jnp.einsum('dk,hl,wm,klmo->dhwo', md, mh, mw, gvec3)
    bsum = jnp.einsum('dk,hl,wm,klmo->dhwo', md, mh, mw, bvec3)

    voxels = cnt.reshape(1, Lp) * float(C_in)
    vc = jnp.maximum(voxels, 2.0)
    pad_l = ((0, 0), (0, L - Lp))
    ivox = jnp.pad(1.0 / voxels, pad_l, constant_values=1.0)
    ibes = jnp.pad(jnp.sqrt((vc - 1.0) / vc), pad_l, constant_values=1.0)
    g_flat = jnp.pad(gsum.reshape(Lp, C_out).T, pad_l)
    bb_flat = jnp.pad(bsum.reshape(Lp, C_out).T + bias[:, None], pad_l)

    # Packed per-voxel constants: rows 0/1 = stats factors, rows 8.. = affine terms.
    R = _round_up(8 + 2 * C_out, 8)
    consts = jnp.zeros((R, L), jnp.float32)
    consts = consts.at[0:1].set(ivox).at[1:2].set(ibes)
    consts = consts.at[8:8 + C_out].set(g_flat).at[8 + C_out:8 + 2 * C_out].set(bb_flat)

    kernel = functools.partial(
        _nhn_kernel, C_out=C_out, C_pad=C_pad, K=K, Wp=Wp, HpWp=HpWp,
        M=M, BASE0=BASE0, TILE_L=tile_l, eps=float(eps))

    out_flat = pl.pallas_call(
        kernel,
        out_shape=jax.ShapeDtypeStruct((B, C_out, L), jnp.float32),
        grid_spec=pltpu.PrefetchScalarGridSpec(
            num_scalar_prefetch=0,
            grid=(B, nt),
            in_specs=[
                pl.BlockSpec((None, C_pad, tile_l), lambda b, t: (b, 0, t)),
                pl.BlockSpec((None, C_pad, tile_l), lambda b, t: (b, 0, t + 1)),
                pl.BlockSpec((C_out + 1, KV * C_pad), lambda b, t: (0, 0)),
                pl.BlockSpec((R, tile_l), lambda b, t: (0, t)),
            ],
            out_specs=pl.BlockSpec((None, C_out, tile_l), lambda b, t: (b, 0, t)),
            scratch_shapes=[pltpu.VMEM((KV * C_pad, tile_l), matmul_dtype)],
        ),
        compiler_params=pltpu.CompilerParams(
            dimension_semantics=("parallel", "parallel"),
            vmem_limit_bytes=32 * 1024 * 1024,
        ),
    )(x_ext, x_ext, wg_aug, consts)

    # Lane-dense padded-domain result -> crop interior and restore NDHWC (layout plumbing).
    out = out_flat[:, :, :Lp].reshape(B, C_out, Dp, Hp, Wp)
    out = out[:, :, P:P + D, P:P + H, P:P + W]
    return jnp.transpose(out, (0, 2, 3, 4, 1))


def nhn_conv3d_ref(x, weight, gamma, beta, bias, *, eps=1e-5):
    """Pure-JAX reference with identical math (for a sanity check)."""
    B, D, H, W, C_in = x.shape
    K = weight.shape[0]
    C_out = weight.shape[-1]
    P = K // 2
    pad = ((0, 0), (P, P), (P, P), (P, P), (0, 0))
    xp = jnp.pad(x, pad)
    mp = jnp.pad(jnp.ones((B, D, H, W, 1), jnp.float32), pad)

    w_flat = weight.reshape(K * K * K, C_in, C_out)
    wg = gamma[None, :, None] * w_flat
    gvec = jnp.einsum('kio,i->ko', w_flat, gamma)
    bvec = jnp.einsum('kio,i->ko', w_flat, beta)

    conv = jnp.zeros((B, D, H, W, C_out), jnp.float32)
    gsum = jnp.zeros((B, D, H, W, C_out), jnp.float32)
    bsum = jnp.zeros((B, D, H, W, C_out), jnp.float32)
    cnt = jnp.zeros((B, D, H, W, 1), jnp.float32)
    sx = jnp.zeros((B, D, H, W, 1), jnp.float32)
    sxx = jnp.zeros((B, D, H, W, 1), jnp.float32)
    ki = 0
    for kd in range(K):
        for kh in range(K):
            for kw in range(K):
                xk = xp[:, kd:kd + D, kh:kh + H, kw:kw + W, :]
                mk = mp[:, kd:kd + D, kh:kh + H, kw:kw + W, :]
                conv = conv + jnp.einsum('bdhwc,co->bdhwo', xk, wg[ki])
                gsum = gsum + mk * gvec[ki]
                bsum = bsum + mk * bvec[ki]
                cnt = cnt + mk
                sx = sx + xk.sum(-1, keepdims=True)
                sxx = sxx + (xk * xk).sum(-1, keepdims=True)
                ki += 1
    voxels = cnt * float(C_in)
    means = sx / voxels
    sq_means = sxx / voxels
    biased = jnp.sqrt(jnp.maximum(sq_means - means * means, 0.0) + eps)
    vc = jnp.maximum(voxels, 2.0)
    stds = jnp.sqrt(vc / (vc - 1.0)) * biased
    return conv / stds - gsum / stds * means + bsum + bias.reshape(1, 1, 1, 1, C_out)


if __name__ == "__main__":
    key = jax.random.PRNGKey(0)
    kx, kw, kg, kb, kbias = jax.random.split(key, 5)

    B, C_in, C_out, D, H, W, K = 2, 4, 8, 8, 8, 8, 3

    x = jax.random.normal(kx, (B, D, H, W, C_in), dtype=jnp.float32)
    # Module __init__ uses gamma=1, beta=0, bias=0; perturb deterministically so
    # every term of the forward pass is exercised.
    weight = 0.1 * jax.random.normal(kw, (K, K, K, C_in, C_out), dtype=jnp.float32)
    gamma = 1.0 + 0.1 * jax.random.normal(kg, (C_in,), dtype=jnp.float32)
    beta = 0.1 * jax.random.normal(kb, (C_in,), dtype=jnp.float32)
    bias = 0.1 * jax.random.normal(kbias, (C_out,), dtype=jnp.float32)

    out = jax.block_until_ready(jax.jit(nhn_conv3d)(x, weight, gamma, beta, bias))
    ref = jax.block_until_ready(nhn_conv3d_ref(x, weight, gamma, beta, bias))

    assert out.shape == (B, D, H, W, C_out)
    err = float(jnp.max(jnp.abs(out - ref)))
    assert err < 1e-2, f"max abs err {err}"
    print("KERNEL_OK")
</pallas_src>

<mosaic_0001>
module attributes {stable_mosaic.version = 11 : i64} {
  func.func @_nhn_kernel(%arg0: i32, %arg1: i32, %arg2: memref<1x8x512xf32, #tpu.memory_space<vmem>>, %arg3: memref<1x8x512xf32, #tpu.memory_space<vmem>>, %arg4: memref<9x216xf32, #tpu.memory_space<vmem>>, %arg5: memref<24x512xf32, #tpu.memory_space<vmem>>, %arg6: memref<1x8x512xf32, #tpu.memory_space<vmem>>, %arg7: memref<216x512xf32, #tpu.memory_space<vmem>>) attributes {dimension_semantics = [#tpu.dimension_semantics<parallel>, #tpu.dimension_semantics<parallel>], iteration_bounds = array<i64: 2, 2>, scalar_prefetch = 0 : i64, scratch_operands = 1 : i64, tpu.core_type = #tpu.core_type<tc>, window_params = [{transform_indices = @transform_0, window_bounds = array<i64: 1, 8, 512>}, {transform_indices = @transform_1, window_bounds = array<i64: 1, 8, 512>}, {pipeline_mode = #tpu.pipeline_mode<synchronous>, transform_indices = @transform_2, window_bounds = array<i64: 9, 216>}, {transform_indices = @transform_3, window_bounds = array<i64: 24, 512>}, {transform_indices = @transform_4, window_bounds = array<i64: 1, 8, 512>}]} {
    %c0 = arith.constant 0 : index
    %c0_0 = arith.constant 0 : index
    %c0_1 = arith.constant 0 : index
    %0 = vector.load %arg2[%c0, %c0_0, %c0_1] : memref<1x8x512xf32, #tpu.memory_space<vmem>>, vector<1x8x512xf32>
    %1 = vector.shape_cast %0 : vector<1x8x512xf32> to vector<8x512xf32>
    %c0_2 = arith.constant 0 : index
    %c0_3 = arith.constant 0 : index
    %c0_4 = arith.constant 0 : index
    %2 = vector.load %arg3[%c0_2, %c0_3, %c0_4] : memref<1x8x512xf32, #tpu.memory_space<vmem>>, vector<1x8x512xf32>
    %3 = vector.shape_cast %2 : vector<1x8x512xf32> to vector<8x512xf32>
    %4 = tpu.concatenate %1, %3 in 1 : vector<8x512xf32>, vector<8x512xf32> -> vector<8x1024xf32>
    %5 = vector.extract_strided_slice %4 {offsets = [0, 89], sizes = [8, 512], strides = [1, 1]} : vector<8x1024xf32> to vector<8x512xf32>
    %c0_5 = arith.constant 0 : index
    %c0_6 = arith.constant 0 : index
    %6 = vector.load %arg7[%c0_5, %c0_6] : memref<216x512xf32, #tpu.memory_space<vmem>>, vector<8x512xf32>
    tpu.vector_store %arg7[%c0_5, %c0_6], %5 {strides = array<i32>} : memref<216x512xf32, #tpu.memory_space<vmem>>, vector<8x512xf32>,
    %7 = vector.extract_strided_slice %4 {offsets = [0, 90], sizes = [8, 512], strides = [1, 1]} : vector<8x1024xf32> to vector<8x512xf32>
    %c8 = arith.constant 8 : index
    %c0_7 = arith.constant 0 : index
    %8 = vector.load %arg7[%c8, %c0_7] : memref<216x512xf32, #tpu.memory_space<vmem>>, vector<8x512xf32>
    tpu.vector_store %arg7[%c8, %c0_7], %7 {strides = array<i32>} : memref<216x512xf32, #tpu.memory_space<vmem>>, vector<8x512xf32>,
    %9 = vector.extract_strided_slice %4 {offsets = [0, 91], sizes = [8, 512], strides = [1, 1]} : vector<8x1024xf32> to vector<8x512xf32>
    %c16 = arith.constant 16 : index
    %c0_8 = arith.constant 0 : index
    %10 = vector.load %arg7[%c16, %c0_8] : memref<216x512xf32, #tpu.memory_space<vmem>>, vector<8x512xf32>
    tpu.vector_store %arg7[%c16, %c0_8], %9 {strides = array<i32>} : memref<216x512xf32, #tpu.memory_space<vmem>>, vector<8x512xf32>,
    %11 = vector.extract_strided_slice %4 {offsets = [0, 99], sizes = [8, 512], strides = [1, 1]} : vector<8x1024xf32> to vector<8x512xf32>
    %c24 = arith.constant 24 : index
    %c0_9 = arith.constant 0 : index
    %12 = vector.load %arg7[%c24, %c0_9] : memref<216x512xf32, #tpu.memory_space<vmem>>, vector<8x512xf32>
    tpu.vector_store %arg7[%c24, %c0_9], %11 {strides = array<i32>} : memref<216x512xf32, #tpu.memory_space<vmem>>, vector<8x512xf32>,
    %13 = vector.extract_strided_slice %4 {offsets = [0, 100], sizes = [8, 512], strides = [1, 1]} : vector<8x1024xf32> to vector<8x512xf32>
    %c32 = arith.constant 32 : index
    %c0_10 = arith.constant 0 : index
    %14 = vector.load %arg7[%c32, %c0_10] : memref<216x512xf32, #tpu.memory_space<vmem>>, vector<8x512xf32>
    tpu.vector_store %arg7[%c32, %c0_10], %13 {strides = array<i32>} : memref<216x512xf32, #tpu.memory_space<vmem>>, vector<8x512xf32>,
    %15 = vector.extract_strided_slice %4 {offsets = [0, 101], sizes = [8, 512], strides = [1, 1]} : vector<8x1024xf32> to vector<8x512xf32>
    %c40 = arith.constant 40 : index
    %c0_11 = arith.constant 0 : index
    %16 = vector.load %arg7[%c40, %c0_11] : memref<216x512xf32, #tpu.memory_space<vmem>>, vector<8x512xf32>
    tpu.vector_store %arg7[%c40, %c0_11], %15 {strides = array<i32>} : memref<216x512xf32, #tpu.memory_space<vmem>>, vector<8x512xf32>,
    %17 = vector.extract_strided_slice %4 {offsets = [0, 109], sizes = [8, 512], strides = [1, 1]} : vector<8x1024xf32> to vector<8x512xf32>
    %c48 = arith.constant 48 : index
    %c0_12 = arith.constant 0 : index
    %18 = vector.load %arg7[%c48, %c0_12] : memref<216x512xf32, #tpu.memory_space<vmem>>, vector<8x512xf32>
    tpu.vector_store %arg7[%c48, %c0_12], %17 {strides = array<i32>} : memref<216x512xf32, #tpu.memory_space<vmem>>, vector<8x512xf32>,
    %19 = vector.extract_strided_slice %4 {offsets = [0, 110], sizes = [8, 512], strides = [1, 1]} : vector<8x1024xf32> to vector<8x512xf32>
    %c56 = arith.constant 56 : index
    %c0_13 = arith.constant 0 : index
    %20 = vector.load %arg7[%c56, %c0_13] : memref<216x512xf32, #tpu.memory_space<vmem>>, vector<8x512xf32>
    tpu.vector_store %arg7[%c56, %c0_13], %19 {strides = array<i32>} : memref<216x512xf32, #tpu.memory_space<vmem>>, vector<8x512xf32>,
    %21 = vector.extract_strided_slice %4 {offsets = [0, 111], sizes = [8, 512], strides = [1, 1]} : vector<8x1024xf32> to vector<8x512xf32>
    %c64 = arith.constant 64 : index
    %c0_14 = arith.constant 0 : index
    %22 = vector.load %arg7[%c64, %c0_14] : memref<216x512xf32, #tpu.memory_space<vmem>>, vector<8x512xf32>
    tpu.vector_store %arg7[%c64, %c0_14], %21 {strides = array<i32>} : memref<216x512xf32, #tpu.memory_space<vmem>>, vector<8x512xf32>,
    %23 = vector.extract_strided_slice %4 {offsets = [0, 189], sizes = [8, 512], strides = [1, 1]} : vector<8x1024xf32> to vector<8x512xf32>
    %c72 = arith.constant 72 : index
    %c0_15 = arith.constant 0 : index
    %24 = vector.load %arg7[%c72, %c0_15] : memref<216x512xf32, #tpu.memory_space<vmem>>, vector<8x512xf32>
    tpu.vector_store %arg7[%c72, %c0_15], %23 {strides = array<i32>} : memref<216x512xf32, #tpu.memory_space<vmem>>, vector<8x512xf32>,
    %25 = vector.extract_strided_slice %4 {offsets = [0, 190], sizes = [8, 512], strides = [1, 1]} : vector<8x1024xf32> to vector<8x512xf32>
    %c80 = arith.constant 80 : index
    %c0_16 = arith.constant 0 : index
    %26 = vector.load %arg7[%c80, %c0_16] : memref<216x512xf32, #tpu.memory_space<vmem>>, vector<8x512xf32>
    tpu.vector_store %arg7[%c80, %c0_16], %25 {strides = array<i32>} : memref<216x512xf32, #tpu.memory_space<vmem>>, vector<8x512xf32>,
    %27 = vector.extract_strided_slice %4 {offsets = [0, 191], sizes = [8, 512], strides = [1, 1]} : vector<8x1024xf32> to vector<8x512xf32>
    %c88 = arith.constant 88 : index
    %c0_17 = arith.constant 0 : index
    %28 = vector.load %arg7[%c88, %c0_17] : memref<216x512xf32, #tpu.memory_space<vmem>>, vector<8x512xf32>
    tpu.vector_store %arg7[%c88, %c0_17], %27 {strides = array<i32>} : memref<216x512xf32, #tpu.memory_space<vmem>>, vector<8x512xf32>,
    %29 = vector.extract_strided_slice %4 {offsets = [0, 199], sizes = [8, 512], strides = [1, 1]} : vector<8x1024xf32> to vector<8x512xf32>
    %c96 = arith.constant 96 : index
    %c0_18 = arith.constant 0 : index
    %30 = vector.load %arg7[%c96, %c0_18] : memref<216x512xf32, #tpu.memory_space<vmem>>, vector<8x512xf32>
    tpu.vector_store %arg7[%c96, %c0_18], %29 {strides = array<i32>} : memref<216x512xf32, #tpu.memory_space<vmem>>, vector<8x512xf32>,
    %31 = vector.extract_strided_slice %4 {offsets = [0, 200], sizes = [8, 512], strides = [1, 1]} : vector<8x1024xf32> to vector<8x512xf32>
    %c104 = arith.constant 104 : index
    %c0_19 = arith.constant 0 : index
    %32 = vector.load %arg7[%c104, %c0_19] : memref<216x512xf32, #tpu.memory_space<vmem>>, vector<8x512xf32>
    tpu.vector_store %arg7[%c104, %c0_19], %31 {strides = array<i32>} : memref<216x512xf32, #tpu.memory_space<vmem>>, vector<8x512xf32>,
    %33 = vector.extract_strided_slice %4 {offsets = [0, 201], sizes = [8, 512], strides = [1, 1]} : vector<8x1024xf32> to vector<8x512xf32>
    %c112 = arith.constant 112 : index
    %c0_20 = arith.constant 0 : index
    %34 = vector.load %arg7[%c112, %c0_20] : memref<216x512xf32, #tpu.memory_space<vmem>>, vector<8x512xf32>
    tpu.vector_store %arg7[%c112, %c0_20], %33 {strides = array<i32>} : memref<216x512xf32, #tpu.memory_space<vmem>>, vector<8x512xf32>,
    %35 = vector.extract_strided_slice %4 {offsets = [0, 209], sizes = [8, 512], strides = [1, 1]} : vector<8x1024xf32> to vector<8x512xf32>
    %c120 = arith.constant 120 : index
    %c0_21 = arith.constant 0 : index
    %36 = vector.load %arg7[%c120, %c0_21] : memref<216x512xf32, #tpu.memory_space<vmem>>, vector<8x512xf32>
    tpu.vector_store %arg7[%c120, %c0_21], %35 {strides = array<i32>} : memref<216x512xf32, #tpu.memory_space<vmem>>, vector<8x512xf32>,
    %37 = vector.extract_strided_slice %4 {offsets = [0, 210], sizes = [8, 512], strides = [1, 1]} : vector<8x1024xf32> to vector<8x512xf32>
    %c128 = arith.constant 128 : index
    %c0_22 = arith.constant 0 : index
    %38 = vector.load %arg7[%c128, %c0_22] : memref<216x512xf32, #tpu.memory_space<vmem>>, vector<8x512xf32>
    tpu.vector_store %arg7[%c128, %c0_22], %37 {strides = array<i32>} : memref<216x512xf32, #tpu.memory_space<vmem>>, vector<8x512xf32>,
    %39 = vector.extract_strided_slice %4 {offsets = [0, 211], sizes = [8, 512], strides = [1, 1]} : vector<8x1024xf32> to vector<8x512xf32>
    %c136 = arith.constant 136 : index
    %c0_23 = arith.constant 0 : index
    %40 = vector.load %arg7[%c136, %c0_23] : memref<216x512xf32, #tpu.memory_space<vmem>>, vector<8x512xf32>
    tpu.vector_store %arg7[%c136, %c0_23], %39 {strides = array<i32>} : memref<216x512xf32, #tpu.memory_space<vmem>>, vector<8x512xf32>,
    %41 = vector.extract_strided_slice %4 {offsets = [0, 289], sizes = [8, 512], strides = [1, 1]} : vector<8x1024xf32> to vector<8x512xf32>
    %c144 = arith.constant 144 : index
    %c0_24 = arith.constant 0 : index
    %42 = vector.load %arg7[%c144, %c0_24] : memref<216x512xf32, #tpu.memory_space<vmem>>, vector<8x512xf32>
    tpu.vector_store %arg7[%c144, %c0_24], %41 {strides = array<i32>} : memref<216x512xf32, #tpu.memory_space<vmem>>, vector<8x512xf32>,
    %43 = vector.extract_strided_slice %4 {offsets = [0, 290], sizes = [8, 512], strides = [1, 1]} : vector<8x1024xf32> to vector<8x512xf32>
    %c152 = arith.constant 152 : index
    %c0_25 = arith.constant 0 : index
    %44 = vector.load %arg7[%c152, %c0_25] : memref<216x512xf32, #tpu.memory_space<vmem>>, vector<8x512xf32>
    tpu.vector_store %arg7[%c152, %c0_25], %43 {strides = array<i32>} : memref<216x512xf32, #tpu.memory_space<vmem>>, vector<8x512xf32>,
    %45 = vector.extract_strided_slice %4 {offsets = [0, 291], sizes = [8, 512], strides = [1, 1]} : vector<8x1024xf32> to vector<8x512xf32>
    %c160 = arith.constant 160 : index
    %c0_26 = arith.constant 0 : index
    %46 = vector.load %arg7[%c160, %c0_26] : memref<216x512xf32, #tpu.memory_space<vmem>>, vector<8x512xf32>
    tpu.vector_store %arg7[%c160, %c0_26], %45 {strides = array<i32>} : memref<216x512xf32, #tpu.memory_space<vmem>>, vector<8x512xf32>,
    %47 = vector.extract_strided_slice %4 {offsets = [0, 299], sizes = [8, 512], strides = [1, 1]} : vector<8x1024xf32> to vector<8x512xf32>
    %c168 = arith.constant 168 : index
    %c0_27 = arith.constant 0 : index
    %48 = vector.load %arg7[%c168, %c0_27] : memref<216x512xf32, #tpu.memory_space<vmem>>, vector<8x512xf32>
    tpu.vector_store %arg7[%c168, %c0_27], %47 {strides = array<i32>} : memref<216x512xf32, #tpu.memory_space<vmem>>, vector<8x512xf32>,
    %49 = vector.extract_strided_slice %4 {offsets = [0, 300], sizes = [8, 512], strides = [1, 1]} : vector<8x1024xf32> to vector<8x512xf32>
    %c176 = arith.constant 176 : index
    %c0_28 = arith.constant 0 : index
    %50 = vector.load %arg7[%c176, %c0_28] : memref<216x512xf32, #tpu.memory_space<vmem>>, vector<8x512xf32>
    tpu.vector_store %arg7[%c176, %c0_28], %49 {strides = array<i32>} : memref<216x512xf32, #tpu.memory_space<vmem>>, vector<8x512xf32>,
    %51 = vector.extract_strided_slice %4 {offsets = [0, 301], sizes = [8, 512], strides = [1, 1]} : vector<8x1024xf32> to vector<8x512xf32>
    %c184 = arith.constant 184 : index
    %c0_29 = arith.constant 0 : index
    %52 = vector.load %arg7[%c184, %c0_29] : memref<216x512xf32, #tpu.memory_space<vmem>>, vector<8x512xf32>
    tpu.vector_store %arg7[%c184, %c0_29], %51 {strides = array<i32>} : memref<216x512xf32, #tpu.memory_space<vmem>>, vector<8x512xf32>,
    %53 = vector.extract_strided_slice %4 {offsets = [0, 309], sizes = [8, 512], strides = [1, 1]} : vector<8x1024xf32> to vector<8x512xf32>
    %c192 = arith.constant 192 : index
    %c0_30 = arith.constant 0 : index
    %54 = vector.load %arg7[%c192, %c0_30] : memref<216x512xf32, #tpu.memory_space<vmem>>, vector<8x512xf32>
    tpu.vector_store %arg7[%c192, %c0_30], %53 {strides = array<i32>} : memref<216x512xf32, #tpu.memory_space<vmem>>, vector<8x512xf32>,
    %55 = vector.extract_strided_slice %4 {offsets = [0, 310], sizes = [8, 512], strides = [1, 1]} : vector<8x1024xf32> to vector<8x512xf32>
    %c200 = arith.constant 200 : index
    %c0_31 = arith.constant 0 : index
    %56 = vector.load %arg7[%c200, %c0_31] : memref<216x512xf32, #tpu.memory_space<vmem>>, vector<8x512xf32>
    tpu.vector_store %arg7[%c200, %c0_31], %55 {strides = array<i32>} : memref<216x512xf32, #tpu.memory_space<vmem>>, vector<8x512xf32>,
    %57 = vector.extract_strided_slice %4 {offsets = [0, 311], sizes = [8, 512], strides = [1, 1]} : vector<8x1024xf32> to vector<8x512xf32>
    %c208 = arith.constant 208 : index
    %c0_32 = arith.constant 0 : index
    %58 = vector.load %arg7[%c208, %c0_32] : memref<216x512xf32, #tpu.memory_space<vmem>>, vector<8x512xf32>
    tpu.vector_store %arg7[%c208, %c0_32], %57 {strides = array<i32>} : memref<216x512xf32, #tpu.memory_space<vmem>>, vector<8x512xf32>,
    %c0_33 = arith.constant 0 : index
    %c0_34 = arith.constant 0 : index
    %59 = vector.load %arg4[%c0_33, %c0_34] : memref<9x216xf32, #tpu.memory_space<vmem>>, vector<9x216xf32>
    %c0_35 = arith.constant 0 : index
    %c0_36 = arith.constant 0 : index
    %60 = vector.load %arg7[%c0_35, %c0_36] : memref<216x512xf32, #tpu.memory_space<vmem>>, vector<216x512xf32>
    %cst = arith.constant dense<0.000000e+00> : vector<9x512xf32>
    %61 = tpu.matmul %59, %60, %cst {dimension_numbers = #tpu.dot_dimension_numbers<[1], [0], [0], [1], [0, 0, 1, 1], [], []>} : vector<9x216xf32>, vector<216x512xf32>, vector<9x512xf32> -> vector<9x512xf32>
    %62 = vector.extract_strided_slice %61 {offsets = [0, 0], sizes = [8, 512], strides = [1, 1]} : vector<9x512xf32> to vector<8x512xf32>
    %63 = vector.extract_strided_slice %61 {offsets = [8, 0], sizes = [1, 512], strides = [1, 1]} : vector<9x512xf32> to vector<1x512xf32>
    %64 = vector.extract_strided_slice %4 {offsets = [0, 89], sizes = [8, 734], strides = [1, 1]} : vector<8x1024xf32> to vector<8x734xf32>
    %65 = arith.mulf %64, %64 : vector<8x734xf32>
    %cst_37 = arith.constant dense<0.000000e+00> : vector<734xf32>
    %66 = vector.multi_reduction <add>, %65, %cst_37 [0] : vector<8x734xf32> to vector<734xf32>
    %67 = vector.shape_cast %66 : vector<734xf32> to vector<1x734xf32>
    %68 = vector.extract_strided_slice %67 {offsets = [0, 0], sizes = [1, 732], strides = [1, 1]} : vector<1x734xf32> to vector<1x732xf32>
    %69 = vector.extract_strided_slice %67 {offsets = [0, 1], sizes = [1, 732], strides = [1, 1]} : vector<1x734xf32> to vector<1x732xf32>
    %70 = arith.addf %68, %69 : vector<1x732xf32>
    %71 = vector.extract_strided_slice %67 {offsets = [0, 2], sizes = [1, 732], strides = [1, 1]} : vector<1x734xf32> to vector<1x732xf32>
    %72 = arith.addf %70, %71 : vector<1x732xf32>
    %73 = vector.extract_strided_slice %72 {offsets = [0, 0], sizes = [1, 712], strides = [1, 1]} : vector<1x732xf32> to vector<1x712xf32>
    %74 = vector.extract_strided_slice %72 {offsets = [0, 10], sizes = [1, 712], strides = [1, 1]} : vector<1x732xf32> to vector<1x712xf32>
    %75 = arith.addf %73, %74 : vector<1x712xf32>
    %76 = vector.extract_strided_slice %72 {offsets = [0, 20], sizes = [1, 712], strides = [1, 1]} : vector<1x732xf32> to vector<1x712xf32>
    %77 = arith.addf %75, %76 : vector<1x712xf32>
    %78 = vector.extract_strided_slice %77 {offsets = [0, 0], sizes = [1, 512], strides = [1, 1]} : vector<1x712xf32> to vector<1x512xf32>
    %79 = vector.extract_strided_slice %77 {offsets = [0, 100], sizes = [1, 512], strides = [1, 1]} : vector<1x712xf32> to vector<1x512xf32>
    %80 = arith.addf %78, %79 : vector<1x512xf32>
    %81 = vector.extract_strided_slice %77 {offsets = [0, 200], sizes = [1, 512], strides = [1, 1]} : vector<1x712xf32> to vector<1x512xf32>
    %82 = arith.addf %80, %81 : vector<1x512xf32>
    %c0_38 = arith.constant 0 : index
    %c0_39 = arith.constant 0 : index
    %83 = vector.load %arg5[%c0_38, %c0_39] : memref<24x512xf32, #tpu.memory_space<vmem>>, vector<1x512xf32>
    %c1 = arith.constant 1 : index
    %c0_40 = arith.constant 0 : index
    %84 = vector.load %arg5[%c1, %c0_40] : memref<24x512xf32, #tpu.memory_space<vmem>>, vector<1x512xf32>
    %c8_41 = arith.constant 8 : index
    %c0_42 = arith.constant 0 : index
    %85 = vector.load %arg5[%c8_41, %c0_42] : memref<24x512xf32, #tpu.memory_space<vmem>>, vector<8x512xf32>
    %c16_43 = arith.constant 16 : index
    %c0_44 = arith.constant 0 : index
    %86 = vector.load %arg5[%c16_43, %c0_44] : memref<24x512xf32, #tpu.memory_space<vmem>>, vector<8x512xf32>
    %87 = arith.mulf %63, %83 : vector<1x512xf32>
    %88 = arith.mulf %82, %83 : vector<1x512xf32>
    %89 = arith.mulf %87, %87 : vector<1x512xf32>
    %90 = arith.subf %88, %89 : vector<1x512xf32>
    %cst_45 = arith.constant 0.000000e+00 : f32
    %91 = vector.broadcast %cst_45 : f32 to vector<1x512xf32>
    %92 = arith.maximumf %90, %91 : vector<1x512xf32>
    %cst_46 = arith.constant 9.99999974E-6 : f32
    %93 = vector.broadcast %cst_46 : f32 to vector<1x512xf32>
    %94 = arith.addf %92, %93 : vector<1x512xf32>
    %95 = math.rsqrt %94 : vector<1x512xf32>
    %96 = arith.mulf %95, %84 : vector<1x512xf32>
    %97 = vector.broadcast %87 : vector<1x512xf32> to vector<8x512xf32>
    %98 = arith.mulf %85, %97 : vector<8x512xf32>
    %99 = arith.subf %62, %98 : vector<8x512xf32>
    %100 = vector.broadcast %96 : vector<1x512xf32> to vector<8x512xf32>
    %101 = arith.mulf %99, %100 : vector<8x512xf32>
    %102 = arith.addf %101, %86 : vector<8x512xf32>
    %c0_47 = arith.constant 0 : index
    %c0_48 = arith.constant 0 : index
    %c0_49 = arith.constant 0 : index
    %103 = vector.load %arg6[%c0_47, %c0_48, %c0_49] : memref<1x8x512xf32, #tpu.memory_space<vmem>>, vector<1x8x512xf32>
    %104 = vector.shape_cast %103 : vector<1x8x512xf32> to vector<8x512xf32>
    %105 = vector.shape_cast %102 : vector<8x512xf32> to vector<1x8x512xf32>
    tpu.vector_store %arg6[%c0_47, %c0_48, %c0_49], %105 {strides = array<i32>} : memref<1x8x512xf32, #tpu.memory_space<vmem>>, vector<1x8x512xf32>,
    return
  }
  func.func @transform_0(%arg0: i32, %arg1: i32) -> (i32, i32, i32) {
    %c0_i32 = arith.constant 0 : i32
    %c0_i32_0 = arith.constant 0 : i32
    return %arg0, %c0_i32, %arg1 : i32, i32, i32
  }
  func.func @transform_1(%arg0: i32, %arg1: i32) -> (i32, i32, i32) {
    %c1_i32 = arith.constant 1 : i32
    %0 = arith.addi %arg1, %c1_i32 : i32
    %c0_i32 = arith.constant 0 : i32
    %c0_i32_0 = arith.constant 0 : i32
    return %arg0, %c0_i32, %0 : i32, i32, i32
  }
  func.func @transform_2(%arg0: i32, %arg1: i32) -> (i32, i32) {
    %c0_i32 = arith.constant 0 : i32
    %c0_i32_0 = arith.constant 0 : i32
    %c0_i32_1 = arith.constant 0 : i32
    return %c0_i32, %c0_i32_0 : i32, i32
  }
  func.func @transform_3(%arg0: i32, %arg1: i32) -> (i32, i32) {
    %c0_i32 = arith.constant 0 : i32
    %c0_i32_0 = arith.constant 0 : i32
    return %c0_i32, %arg1 : i32, i32
  }
  func.func @transform_4(%arg0: i32, %arg1: i32) -> (i32, i32, i32) {
    %c0_i32 = arith.constant 0 : i32
    %c0_i32_0 = arith.constant 0 : i32
    return %arg0, %c0_i32, %arg1 : i32, i32, i32
  }
}

</mosaic_0001>

<llo_original>
// kernel: nhn_conv3d.1
$region0: #{nhn_conv3d.1}
  #allocation0 [shape = 'u32[]', space=smem, size = 0x4, offset = 0x4, fixed_abs, tag = 'smem constant byte address 0x4 - core index']
  #allocation1 [shape = 'u32[144,128]{1,0:T(1,128)}', space=vmem, size = 0x12000, scoped, tag = 'internal scratch']
  #allocation2 [shape = 'f32[216,512]{1,0:T(8,128)}', space=vmem, size = 0x6c000, scoped, tag = 'scratch operand']
  %s0 = inlined_call_operand.vmem [shape: f32[2,8,1600], index: 0, kind: input, shape index: {}, may-alias: {0,1}]
  %s1 = inlined_call_operand.vmem [shape: f32[2,8,1600], index: 1, kind: input, shape index: {}, may-alias: {0,1}]
  %s2 = inlined_call_operand.vmem [shape: f32[9,216], index: 2, kind: input, shape index: {}]
  %s3 = inlined_call_operand.vmem [shape: f32[24,1024], index: 3, kind: input, shape index: {}]
  %s4 = inlined_call_operand.vmem [shape: f32[2,8,1024], index: 4, kind: output, shape index: {}]
  %s5 = sld [smem:[#allocation0]]
  $region72: #{nhn_conv3d.1} parent=0
    _
  %s7 = ssub.s32 1, %s5
  %s8 = scalar_select 0, %s7, %s5
  $region1: #{nhn_conv3d.1} parent=0
    #allocation3 [shape = 'u8[98304]{0}', space=vmem, size = 0x18000, scoped, tag = 'input window, operand 3']
    loop: start=0, step=1, limit=6
    $region2: #{nhn_conv3d.1} parent=1 // loop_pre_header
      _
    $region3: #{nhn_conv3d.1} parent=1 // loop_header
      %s10 = sphi 0, %s14
      %p11 = scmp.ge.s32.totalorder %s10, 6
      %s17 = sphi 0, %s29
      %s18 = sphi 0, %s25
      %s19 = sphi 0, %s17
      %s20 = sphi 0, %s18
      %s21 = sphi 0, %s19
      %s22 = sphi 0, %s20
      %s34 = sphi 0, %s36
      %s37 = sphi 0, %s34
      %s38 = sphi 0, %s37
      %s54 = sphi 0, %s38
      %s64 = sphi 0, %s66
      %s67 = sphi 0, %s64
      %s68 = sphi 0, %s67
      %s84 = sphi 0, %s68
      %s88 = sphi 0, %s88
      %s90 = sphi 0, %s88
      %s91 = sphi 0, %s90
      %s105 = sphi 0, %s91
      %s111 = sphi 0, %s113
      %s114 = sphi 0, %s111
      %s115 = sphi 0, %s114
      %s131 = sphi 0, %s115
      %s139 = sphi 0, %s141
      %s142 = sphi 0, %s139
      %s143 = sphi 0, %s142
      %s159 = sphi 0, %s143
    $region4: #{nhn_conv3d.1} parent=1 // loop_header_branch
      %13 = sbr.rel (%p11) target = $region8
    $region5: #{nhn_conv3d.1} parent=1 // loop_body
      %s15 = ssub.s32 %s10, 1
      %s16 = ssub.s32 %s10, 2
      %s23 = sadd.s32 1, %s18
      %p24 = scmp.ge.s32.totalorder %s23, 2
      %s25 = scalar_select %p24, 0, %s23
      %s26 = sadd.s32 1, %s17
      %s27 = scalar_select %p24, %s26, %s17
      %p28 = scmp.ge.s32.totalorder %s27, 2
      %s29 = scalar_select %p28, 0, %s27
      %s30 = ssub.s32 %s17, %s29
      %s31 = ssub.s32 %s18, %s25
      %s32 = sor.u32 %s30, %s31
      %p33 = scmp.eq.s32.totalorder %s32, 0
      %s35 = sadd.s32 %s34, 1
      %s36 = scalar_select %p33, %s34, %s35
      %p39 = pneg %p33
      %p40 = scmp.eq.s32.totalorder %s10, 3
      %p41 = por %p39, %p40
      %p42 = scmp.ne.s32.totalorder %s34, %s37
      %p43 = scmp.eq.s32.totalorder %s10, 0
      %p44 = por %p42, %p43
      %p45 = scmp.ne.s32.totalorder %s34, %s37
      %p46 = scmp.eq.s32.totalorder %s15, 3
      %p47 = por %p45, %p46
      %p48 = scmp.ne.s32.totalorder %s37, %s38
      %p49 = scmp.eq.s32.totalorder %s15, 0
      %p50 = por %p48, %p49
      %p51 = scmp.ne.s32.totalorder %s37, %s38
      %p52 = scmp.eq.s32.totalorder %s16, 3
      %p53 = por %p51, %p52
      %p55 = scmp.ne.s32.totalorder %s38, %s54
      %p56 = scmp.eq.s32.totalorder %s16, 0
      %p57 = por %p55, %p56
      %s58 = sadd.s32 %s18, 1
      %s59 = sadd.s32 %s25, 1
      %s60 = ssub.s32 %s17, %s29
      %s61 = ssub.s32 %s58, %s59
      %s62 = sor.u32 %s60, %s61
      %p63 = scmp.eq.s32.totalorder %s62, 0
      %s65 = sadd.s32 %s64, 1
      %s66 = scalar_select %p63, %s64, %s65
      %p69 = pneg %p63
      %p70 = scmp.eq.s32.totalorder %s10, 3
      %p71 = por %p69, %p70
      %p72 = scmp.ne.s32.totalorder %s64, %s67
      %p73 = scmp.eq.s32.totalorder %s10, 0
      %p74 = por %p72, %p73
      %p75 = scmp.ne.s32.totalorder %s64, %s67
      %p76 = scmp.eq.s32.totalorder %s15, 3
      %p77 = por %p75, %p76
      %p78 = scmp.ne.s32.totalorder %s67, %s68
      %p79 = scmp.eq.s32.totalorder %s15, 0
      %p80 = por %p78, %p79
      %p81 = scmp.ne.s32.totalorder %s67, %s68
      %p82 = scmp.eq.s32.totalorder %s16, 3
      %p83 = por %p81, %p82
      %p85 = scmp.ne.s32.totalorder %s68, %s84
      %p86 = scmp.eq.s32.totalorder %s16, 0
      %p87 = por %p85, %p86
      %s89 = sadd.s32 %s88, 1
      %p92 = scmp.eq.s32.totalorder %s10, 3
      %p93 = scmp.ne.s32.totalorder %s88, %s90
      %p94 = scmp.eq.s32.totalorder %s10, 0
      %p95 = por %p93, %p94
      %p96 = scmp.ne.s32.totalorder %s88, %s90
      %p97 = scmp.eq.s32.totalorder %s15, 3
      %p98 = por %p96, %p97
      %p99 = scmp.ne.s32.totalorder %s90, %s91
      %p100 = scmp.eq.s32.totalorder %s15, 0
      %p101 = por %p99, %p100
      %p102 = scmp.ne.s32.totalorder %s90, %s91
      %p103 = scmp.eq.s32.totalorder %s16, 3
      %p104 = por %p102, %p103
      %p106 = scmp.ne.s32.totalorder %s91, %s105
      %p107 = scmp.eq.s32.totalorder %s16, 0
      %p108 = por %p106, %p107
      %s109 = ssub.s32 %s18, %s25
      %p110 = scmp.eq.s32.totalorder %s109, 0
      %s112 = sadd.s32 %s111, 1
      %s113 = scalar_select %p110, %s111, %s112
      %p116 = pneg %p110
      %p117 = scmp.eq.s32.totalorder %s10, 3
      %p118 = por %p116, %p117
      %p119 = scmp.ne.s32.totalorder %s111, %s114
      %p120 = scmp.eq.s32.totalorder %s10, 0
      %p121 = por %p119, %p120
      %p122 = scmp.ne.s32.totalorder %s111, %s114
      %p123 = scmp.eq.s32.totalorder %s15, 3
      %p124 = por %p122, %p123
      %p125 = scmp.ne.s32.totalorder %s114, %s115
      %p126 = scmp.eq.s32.totalorder %s15, 0
      %p127 = por %p125, %p126
      %p128 = scmp.ne.s32.totalorder %s114, %s115
      %p129 = scmp.eq.s32.totalorder %s16, 3
      %p130 = por %p128, %p129
      %p132 = scmp.ne.s32.totalorder %s115, %s131
      %p133 = scmp.eq.s32.totalorder %s16, 0
      %p134 = por %p132, %p133
      %s135 = ssub.s32 %s17, %s29
      %s136 = ssub.s32 %s18, %s25
      %s137 = sor.u32 %s135, %s136
      %p138 = scmp.eq.s32.totalorder %s137, 0
      %s140 = sadd.s32 %s139, 1
      %s141 = scalar_select %p138, %s139, %s140
      %p144 = pneg %p138
      %p145 = scmp.eq.s32.totalorder %s10, 3
      %p146 = por %p144, %p145
      %p147 = scmp.ne.s32.totalorder %s139, %s142
      %p148 = scmp.eq.s32.totalorder %s10, 0
      %p149 = por %p147, %p148
      %p150 = scmp.ne.s32.totalorder %s139, %s142
      %p151 = scmp.eq.s32.totalorder %s15, 3
      %p152 = por %p150, %p151
      %p153 = scmp.ne.s32.totalorder %s142, %s143
      %p154 = scmp.eq.s32.totalorder %s15, 0
      %p155 = por %p153, %p154
      %p156 = scmp.ne.s32.totalorder %s142, %s143
      %p157 = scmp.eq.s32.totalorder %s16, 3
      %p158 = por %p156, %p157
      %p160 = scmp.ne.s32.totalorder %s143, %s159
      %p161 = scmp.eq.s32.totalorder %s16, 0
      %p162 = por %p160, %p161
      %p163 = scmp.le.s32.totalorder 1, %s10
      %p164 = scmp.lt.s32.totalorder %s10, 5
      %p165 = pnand %p163, %p164
      %p166 = pneg %p165
      // Predicated region
      $region9: #{nhn_conv3d.1} parent=5 // pred_check
        _
      $region10: #{nhn_conv3d.1} parent=5 // pred_check_branch
        %168 = sbr.rel (%p165) target = $region12
      $region11: #{nhn_conv3d.1} parent=5 // pred_region
        %s169 = ssub.s32 %s10, 1
        // Predicated region
        $region13: #{nhn_conv3d.1} parent=11 // pred_check
          %p170 = pneg %p101
        $region14: #{nhn_conv3d.1} parent=11 // pred_check_branch
          %172 = sbr.rel (%p170) target = $region16
        $region15: #{nhn_conv3d.1} parent=11 // pred_region
          _
        $region16: #{nhn_conv3d.1} parent=11 // pred_fallthru
          _
      $region12: #{nhn_conv3d.1} parent=5 // pred_fallthru
        _
      %p173 = scmp.lt.s32.totalorder %s10, 4
      // Predicated region
      $region17: #{nhn_conv3d.1} parent=5 // pred_check
        %p174 = pneg %p173
      $region18: #{nhn_conv3d.1} parent=5 // pred_check_branch
        %176 = sbr.rel (%p174) target = $region20
      $region19: #{nhn_conv3d.1} parent=5 // pred_region
        // Predicated region
        $region21: #{nhn_conv3d.1} parent=19 // pred_check
          %p177 = pneg %p44
        $region22: #{nhn_conv3d.1} parent=19 // pred_check_branch
          %179 = sbr.rel (%p177) target = $region24
        $region23: #{nhn_conv3d.1} parent=19 // pred_region
          %s180 = smul.u32 4, %s18
          %s181 = ssub.s32 13, %s180
          %p182 = scmp.lt.s32.totalorder %s181, 4
          %s183 = scalar_select %p182, %s181, 4
          %s184 = smul.u32 128, %s183
          %p185 = scmp.lt.s32.totalorder %s17, 1
          %s186 = scalar_select %p185, %s17, 1
          %p187 = scmp.lt.s32.totalorder %s180, 12
          %s188 = scalar_select %p187, %s180, 12
          %s189 = smul.addr %s186, 13
          %s190 = sadd.s32 %s188, %s189
          %s191 = smul.addr %s190, 8
          %s192 = scalar_lea.vmem %s0, %s191
          %s193 = smul.u32 4, %s18
          %s194 = ssub.s32 13, %s193
          %p195 = scmp.lt.s32.totalorder %s194, 4
          %s196 = scalar_select %p195, %s194, 4
          %s197 = smul.u32 128, %s196
        $region24: #{nhn_conv3d.1} parent=19 // pred_fallthru
          _
        // Predicated region
        $region25: #{nhn_conv3d.1} parent=19 // pred_check
          %p198 = pneg %p74
        $region26: #{nhn_conv3d.1} parent=19 // pred_check_branch
          %200 = sbr.rel (%p198) target = $region28
        $region27: #{nhn_conv3d.1} parent=19 // pred_region
          %s201 = sadd.s32 %s18, 1
          %s202 = smul.u32 4, %s201
          %s203 = ssub.s32 13, %s202
          %p204 = scmp.lt.s32.totalorder %s203, 4
          %s205 = scalar_select %p204, %s203, 4
          %s206 = smul.u32 128, %s205
          %p207 = scmp.lt.s32.totalorder %s17, 1
          %s208 = scalar_select %p207, %s17, 1
          %p209 = scmp.lt.s32.totalorder %s202, 12
          %s210 = scalar_select %p209, %s202, 12
          %s211 = smul.addr %s208, 13
          %s212 = sadd.s32 %s210, %s211
          %s213 = smul.addr %s212, 8
          %s214 = scalar_lea.vmem %s1, %s213
          %s215 = sadd.s32 %s18, 1
          %s216 = smul.u32 4, %s215
          %s217 = ssub.s32 13, %s216
          %p218 = scmp.lt.s32.totalorder %s217, 4
          %s219 = scalar_select %p218, %s217, 4
          %s220 = smul.u32 128, %s219
        $region28: #{nhn_conv3d.1} parent=19 // pred_fallthru
          _
        // Predicated region
        $region29: #{nhn_conv3d.1} parent=19 // pred_check
          %p221 = pneg %p121
        $region30: #{nhn_conv3d.1} parent=19 // pred_check_branch
          %223 = sbr.rel (%p221) target = $region32
        $region31: #{nhn_conv3d.1} parent=19 // pred_region
          %s224 = sand.u32 %s111, 1
          %s225 = sand.u32 %s111, 1
          %s226 = smul.addr %s225, 96
          %s227 = scalar_lea.vmem [#allocation3], %s226
          %s228 = smul.u32 4, %s18
          %s229 = smul.addr %s228, 8
          %s230 = scalar_lea.vmem %s3, %s229
          // Predicated region
          $region33: #{nhn_conv3d.1} parent=31 // pred_check
            _
          $region34: #{nhn_conv3d.1} parent=31 // pred_check_branch
            %232 = sbr.rel (0) target = $region36
          $region35: #{nhn_conv3d.1} parent=31 // pred_region
            // Predicated region
            $region37: #{nhn_conv3d.1} parent=35 // pred_check
              _
            $region38: #{nhn_conv3d.1} parent=35 // pred_check_branch
              %234 = sbr.rel (0) target = $region40
            $region39: #{nhn_conv3d.1} parent=35 // pred_region
              loop: start=0, step=1, limit=1
              $region41: #{nhn_conv3d.1} parent=39 // loop_pre_header
                _
              $region42: #{nhn_conv3d.1} parent=39 // loop_header
                %s236 = sphi 0, %s240
                %p237 = scmp.ge.s32.totalorder %s236, 1
                %s241 = sphi %s230, %s230
                %s242 = sphi %s227, %s227
              $region43: #{nhn_conv3d.1} parent=39 // loop_header_branch
                %239 = sbr.rel (%p237) target = $region47
              $region44: #{nhn_conv3d.1} parent=39 // loop_body
                %v243 = vld [vmem:[%s241] sm:$0xff]
                %244 = vst [vmem:[%s242] sm:$0xff] %v243
                %v245 = vld [vmem:[%s241 + $0x8] sm:$0xff]
                %246 = vst [vmem:[%s242 + $0x8] sm:$0xff] %v245
                %v247 = vld [vmem:[%s241 + $0x10] sm:$0xff]
                %248 = vst [vmem:[%s242 + $0x10] sm:$0xff] %v247
                %v249 = vld [vmem:[%s241 + $0x18] sm:$0xff]
                %250 = vst [vmem:[%s242 + $0x18] sm:$0xff] %v249
                %v251 = vld [vmem:[%s241 + $0x40] sm:$0xff]
                %252 = vst [vmem:[%s242 + $0x20] sm:$0xff] %v251
                %v253 = vld [vmem:[%s241 + $0x48] sm:$0xff]
                %254 = vst [vmem:[%s242 + $0x28] sm:$0xff] %v253
                %v255 = vld [vmem:[%s241 + $0x50] sm:$0xff]
                %256 = vst [vmem:[%s242 + $0x30] sm:$0xff] %v255
                %v257 = vld [vmem:[%s241 + $0x58] sm:$0xff]
                %258 = vst [vmem:[%s242 + $0x38] sm:$0xff] %v257
                %v259 = vld [vmem:[%s241 + $0x80] sm:$0xff]
                %260 = vst [vmem:[%s242 + $0x40] sm:$0xff] %v259
                %v261 = vld [vmem:[%s241 + $0x88] sm:$0xff]
                %262 = vst [vmem:[%s242 + $0x48] sm:$0xff] %v261
                %v263 = vld [vmem:[%s241 + $0x90] sm:$0xff]
                %264 = vst [vmem:[%s242 + $0x50] sm:$0xff] %v263
                %v265 = vld [vmem:[%s241 + $0x98] sm:$0xff]
                %266 = vst [vmem:[%s242 + $0x58] sm:$0xff] %v265
              $region45: #{nhn_conv3d.1} parent=39 // loop_footer
                %s240 = sadd.s32 1, %s236
              $region46: #{nhn_conv3d.1} parent=39 // loop_footer_branch
                %235 = sbr.rel target = $region42
              $region47: #{nhn_conv3d.1} parent=39 // loop_exit
                _
            $region40: #{nhn_conv3d.1} parent=35 // pred_fallthru
              _
            // Predicated region
            $region48: #{nhn_conv3d.1} parent=35 // pred_check
              _
            $region49: #{nhn_conv3d.1} parent=35 // pred_check_branch
              %268 = sbr.rel target = $region51
            $region50: #{nhn_conv3d.1} parent=35 // pred_region
              _
            $region51: #{nhn_conv3d.1} parent=35 // pred_fallthru
              _
          $region36: #{nhn_conv3d.1} parent=31 // pred_fallthru
            _
          %269 = vnop
        $region32: #{nhn_conv3d.1} parent=19 // pred_fallthru
          _
      $region20: #{nhn_conv3d.1} parent=5 // pred_fallthru
        _
      %p270 = scmp.le.s32.totalorder 1, %s10
      %p271 = scmp.lt.s32.totalorder %s10, 5
      %p272 = pnand %p270, %p271
      %p273 = pneg %p272
      // Predicated region
      $region52: #{nhn_conv3d.1} parent=5 // pred_check
        _
      $region53: #{nhn_conv3d.1} parent=5 // pred_check_branch
        %275 = sbr.rel (%p272) target = $region55
      $region54: #{nhn_conv3d.1} parent=5 // pred_region
        %s276 = ssub.s32 %s10, 1
        %s277 = sand.u32 %s114, 1
        %s278 = sand.u32 %s114, 1
        %s279 = smul.addr %s278, 96
        %s280 = scalar_lea.vmem [#allocation3], %s279
        // Predicated region
        $region56: #{nhn_conv3d.1} parent=54 // pred_check
          %p281 = pneg %p127
        $region57: #{nhn_conv3d.1} parent=54 // pred_check_branch
          %283 = sbr.rel (%p281) target = $region59
        $region58: #{nhn_conv3d.1} parent=54 // pred_region
          _
        $region59: #{nhn_conv3d.1} parent=54 // pred_fallthru
          _
        %s284 = smul.u32 4, %s20
        %s285 = ssub.s32 13, %s284
        %p286 = scmp.lt.s32.totalorder %s285, 4
        %s287 = scalar_select %p286, %s285, 4
        %s288 = smul.u32 128, %s287
        %p289 = scmp.lt.s32.totalorder %s19, 1
        %s290 = scalar_select %p289, %s19, 1
        %p291 = scmp.lt.s32.totalorder %s284, 12
        %s292 = scalar_select %p291, %s284, 12
        %s293 = smul.addr %s290, 13
        %s294 = sadd.s32 %s292, %s293
        %s295 = smul.addr %s294, 8
        %s296 = scalar_lea.vmem %s0, %s295
        %p297 = pneg %p50
        %p298 = pneg %p47
        %s299 = sadd.s32 %s20, 1
        %s300 = smul.u32 4, %s299
        %s301 = ssub.s32 13, %s300
        %p302 = scmp.lt.s32.totalorder %s301, 4
        %s303 = scalar_select %p302, %s301, 4
        %s304 = smul.u32 128, %s303
        %p305 = scmp.lt.s32.totalorder %s19, 1
        %s306 = scalar_select %p305, %s19, 1
        %p307 = scmp.lt.s32.totalorder %s300, 12
        %s308 = scalar_select %p307, %s300, 12
        %s309 = smul.addr %s306, 13
        %s310 = sadd.s32 %s308, %s309
        %s311 = smul.addr %s310, 8
        %s312 = scalar_lea.vmem %s1, %s311
        %p313 = pneg %p80
        %p314 = pneg %p77
        %p315 = pneg %p101
        %p316 = pneg %p98
        %s317 = sand.u32 %s114, 1
        %s318 = sand.u32 %s114, 1
        %s319 = smul.addr %s318, 96
        %s320 = scalar_lea.vmem [#allocation3], %s319
        %p321 = pneg %p127
        %p322 = pneg %p124
        %p323 = pneg %p155
        %p324 = pneg %p152
        %s325 = smul.u32 4, %s20
        %p326 = scmp.lt.s32.totalorder %s19, 1
        %s327 = scalar_select %p326, %s19, 1
        %p328 = scmp.lt.s32.totalorder %s325, 7
        %s329 = scalar_select %p328, %s325, 7
        %s330 = smul.addr %s327, 8
        %s331 = sadd.s32 %s329, %s330
        %s332 = smul.addr %s331, 8
        %s333 = scalar_lea.vmem %s4, %s332
        %s334 = smul.u32 4, %s20
        %s335 = ssub.s32 13, %s334
        %p336 = scmp.lt.s32.totalorder %s335, 4
        %s337 = scalar_select %p336, %s335, 4
        %s338 = smul.u32 128, %s337
        %p339 = scmp.lt.s32.totalorder %s19, 1
        %s340 = scalar_select %p339, %s19, 1
        %p341 = scmp.lt.s32.totalorder %s334, 12
        %s342 = scalar_select %p341, %s334, 12
        %s343 = smul.addr %s340, 13
        %s344 = sadd.s32 %s342, %s343
        %s345 = smul.addr %s344, 8
        %s346 = scalar_lea.vmem %s0, %s345
        %s347 = smul.u32 4, %s20
        %s348 = ssub.s32 13, %s347
        %p349 = scmp.lt.s32.totalorder %s348, 4
        %s350 = scalar_select %p349, %s348, 4
        %s351 = smul.u32 128, %s350
        %s352 = sadd.s32 %s20, 1
        %s353 = smul.u32 4, %s352
        %s354 = ssub.s32 13, %s353
        %p355 = scmp.lt.s32.totalorder %s354, 4
        %s356 = scalar_select %p355, %s354, 4
        %s357 = smul.u32 128, %s356
        %p358 = scmp.lt.s32.totalorder %s19, 1
        %s359 = scalar_select %p358, %s19, 1
        %p360 = scmp.lt.s32.totalorder %s353, 12
        %s361 = scalar_select %p360, %s353, 12
        %s362 = smul.addr %s359, 13
        %s363 = sadd.s32 %s361, %s362
        %s364 = smul.addr %s363, 8
        %s365 = scalar_lea.vmem %s1, %s364
        %s366 = sadd.s32 %s20, 1
        %s367 = smul.u32 4, %s366
        %s368 = ssub.s32 13, %s367
        %p369 = scmp.lt.s32.totalorder %s368, 4
        %s370 = scalar_select %p369, %s368, 4
        %s371 = smul.u32 128, %s370
        %s372 = smul.u32 4, %s20
        %s373 = smul.u32 4, %s20
        %p374 = scmp.lt.s32.totalorder %s19, 1
        %s375 = scalar_select %p374, %s19, 1
        %p376 = scmp.lt.s32.totalorder %s373, 7
        %s377 = scalar_select %p376, %s373, 7
        %s378 = smul.addr %s375, 8
        %s379 = sadd.s32 %s377, %s378
        %s380 = smul.addr %s379, 8
        %s381 = scalar_lea.vmem %s4, %s380
        %s382 = smul.u32 4, %s20
        %v383 = vld [vmem:[%s346] sm:$0xff]
        %v384 = vld [vmem:[%s346 + $0x8] sm:$0xff]
        %v385 = vld [vmem:[%s346 + $0x10] sm:$0xff]
        %v386 = vld [vmem:[%s346 + $0x18] sm:$0xff]
        %v387 = vld [vmem:[%s365] sm:$0xff]
        %v388 = vld [vmem:[%s365 + $0x8] sm:$0xff]
        %v389 = vld [vmem:[%s365 + $0x10] sm:$0xff]
        %395 = vrot.lane.b32.xlu0 %v383, 39
        %v396 = vpop.permute.xlu0 %395
        %397 = vrot.lane.b32.xlu0 %v384, 39
        %v398 = vpop.permute.xlu0 %397
        %399 = vrot.lane.b32.xlu0 %v385, 39
        %v400 = vpop.permute.xlu0 %399
        %401 = vrot.lane.b32.xlu0 %v386, 39
        %v402 = vpop.permute.xlu0 %401
        %403 = vrot.lane.b32.xlu0 %v387, 39
        %v404 = vpop.permute.xlu0 %403
        %vm405 = vcmask 318464
        %v406 = vsel %vm405, %v396, %v398
        %v407 = vsel %vm405, %v398, %v400
        %v408 = vsel %vm405, %v400, %v402
        %v409 = vsel %vm405, %v402, %v404
        %414 = vst [vmem:[#allocation2] sm:$0xff] %v406
        %415 = vst [vmem:[#allocation2 + $0x8] sm:$0xff] %v407
        %416 = vst [vmem:[#allocation2 + $0x10] sm:$0xff] %v408
        %417 = vst [vmem:[#allocation2 + $0x18] sm:$0xff] %v409
        %418 = vrot.lane.b32.xlu0 %v383, 38
        %v419 = vpop.permute.xlu0 %418
        %420 = vrot.lane.b32.xlu0 %v384, 38
        %v421 = vpop.permute.xlu0 %420
        %422 = vrot.lane.b32.xlu0 %v385, 38
        %v423 = vpop.permute.xlu0 %422
        %424 = vrot.lane.b32.xlu0 %v386, 38
        %v425 = vpop.permute.xlu0 %424
        %426 = vrot.lane.b32.xlu0 %v387, 38
        %v427 = vpop.permute.xlu0 %426
        %vm428 = vcmask 310272
        %v429 = vsel %vm428, %v419, %v421
        %v430 = vsel %vm428, %v421, %v423
        %v431 = vsel %vm428, %v423, %v425
        %v432 = vsel %vm428, %v425, %v427
        %437 = vst [vmem:[#allocation2 + $0x20] sm:$0xff] %v429
        %438 = vst [vmem:[#allocation2 + $0x28] sm:$0xff] %v430
        %439 = vst [vmem:[#allocation2 + $0x30] sm:$0xff] %v431
        %440 = vst [vmem:[#allocation2 + $0x38] sm:$0xff] %v432
        %441 = vrot.lane.b32.xlu0 %v383, 37
        %v442 = vpop.permute.xlu0 %441
        %443 = vrot.lane.b32.xlu0 %v384, 37
        %v444 = vpop.permute.xlu0 %443
        %445 = vrot.lane.b32.xlu0 %v385, 37
        %v446 = vpop.permute.xlu0 %445
        %447 = vrot.lane.b32.xlu0 %v386, 37
        %v448 = vpop.permute.xlu0 %447
        %449 = vrot.lane.b32.xlu0 %v387, 37
        %v450 = vpop.permute.xlu0 %449
        %vm451 = vcmask 302080
        %v452 = vsel %vm451, %v442, %v444
        %v453 = vsel %vm451, %v444, %v446
        %v454 = vsel %vm451, %v446, %v448
        %v455 = vsel %vm451, %v448, %v450
        %460 = vst [vmem:[#allocation2 + $0x40] sm:$0xff] %v452
        %461 = vst [vmem:[#allocation2 + $0x48] sm:$0xff] %v453
        %462 = vst [vmem:[#allocation2 + $0x50] sm:$0xff] %v454
        %463 = vst [vmem:[#allocation2 + $0x58] sm:$0xff] %v455
        %464 = vrot.lane.b32.xlu0 %v383, 29
        %v465 = vpop.permute.xlu0 %464
        %466 = vrot.lane.b32.xlu0 %v384, 29
        %v467 = vpop.permute.xlu0 %466
        %468 = vrot.lane.b32.xlu0 %v385, 29
        %v469 = vpop.permute.xlu0 %468
        %470 = vrot.lane.b32.xlu0 %v386, 29
        %v471 = vpop.permute.xlu0 %470
        %472 = vrot.lane.b32.xlu0 %v387, 29
        %v473 = vpop.permute.xlu0 %472
        %vm474 = vcmask 236544
        %v475 = vsel %vm474, %v465, %v467
        %v476 = vsel %vm474, %v467, %v469
        %v477 = vsel %vm474, %v469, %v471
        %v478 = vsel %vm474, %v471, %v473
        %483 = vst [vmem:[#allocation2 + $0x60] sm:$0xff] %v475
        %484 = vst [vmem:[#allocation2 + $0x68] sm:$0xff] %v476
        %485 = vst [vmem:[#allocation2 + $0x70] sm:$0xff] %v477
        %486 = vst [vmem:[#allocation2 + $0x78] sm:$0xff] %v478
        %487 = vrot.lane.b32.xlu0 %v383, 28
        %v488 = vpop.permute.xlu0 %487
        %489 = vrot.lane.b32.xlu0 %v384, 28
        %v490 = vpop.permute.xlu0 %489
        %491 = vrot.lane.b32.xlu0 %v385, 28
        %v492 = vpop.permute.xlu0 %491
        %493 = vrot.lane.b32.xlu0 %v386, 28
        %v494 = vpop.permute.xlu0 %493
        %495 = vrot.lane.b32.xlu0 %v387, 28
        %v496 = vpop.permute.xlu0 %495
        %vm497 = vcmask 228352
        %v498 = vsel %vm497, %v488, %v490
        %v499 = vsel %vm497, %v490, %v492
        %v500 = vsel %vm497, %v492, %v494
        %v501 = vsel %vm497, %v494, %v496
        %506 = vst [vmem:[#allocation2 + $0x80] sm:$0xff] %v498
        %507 = vst [vmem:[#allocation2 + $0x88] sm:$0xff] %v499
        %508 = vst [vmem:[#allocation2 + $0x90] sm:$0xff] %v500
        %509 = vst [vmem:[#allocation2 + $0x98] sm:$0xff] %v501
        %510 = vrot.lane.b32.xlu0 %v383, 27
        %v511 = vpop.permute.xlu0 %510
        %512 = vrot.lane.b32.xlu0 %v384, 27
        %v513 = vpop.permute.xlu0 %512
        %514 = vrot.lane.b32.xlu0 %v385, 27
        %v515 = vpop.permute.xlu0 %514
        %516 = vrot.lane.b32.xlu0 %v386, 27
        %v517 = vpop.permute.xlu0 %516
        %518 = vrot.lane.b32.xlu0 %v387, 27
        %v519 = vpop.permute.xlu0 %518
        %vm520 = vcmask 220160
        %v521 = vsel %vm520, %v511, %v513
        %v522 = vsel %vm520, %v513, %v515
        %v523 = vsel %vm520, %v515, %v517
        %v524 = vsel %vm520, %v517, %v519
        %529 = vst [vmem:[#allocation2 + $0xa0] sm:$0xff] %v521
        %530 = vst [vmem:[#allocation2 + $0xa8] sm:$0xff] %v522
        %531 = vst [vmem:[#allocation2 + $0xb0] sm:$0xff] %v523
        %532 = vst [vmem:[#allocation2 + $0xb8] sm:$0xff] %v524
        %533 = vrot.lane.b32.xlu0 %v383, 19
        %v534 = vpop.permute.xlu0 %533
        %535 = vrot.lane.b32.xlu0 %v384, 19
        %v536 = vpop.permute.xlu0 %535
        %537 = vrot.lane.b32.xlu0 %v385, 19
        %v538 = vpop.permute.xlu0 %537
        %539 = vrot.lane.b32.xlu0 %v386, 19
        %v540 = vpop.permute.xlu0 %539
        %541 = vrot.lane.b32.xlu0 %v387, 19
        %v542 = vpop.permute.xlu0 %541
        %vm543 = vcmask 154624
        %v544 = vsel %vm543, %v534, %v536
        %v545 = vsel %vm543, %v536, %v538
        %v546 = vsel %vm543, %v538, %v540
        %v547 = vsel %vm543, %v540, %v542
        %552 = vst [vmem:[#allocation2 + $0xc0] sm:$0xff] %v544
        %553 = vst [vmem:[#allocation2 + $0xc8] sm:$0xff] %v545
        %554 = vst [vmem:[#allocation2 + $0xd0] sm:$0xff] %v546
        %555 = vst [vmem:[#allocation2 + $0xd8] sm:$0xff] %v547
        %556 = vrot.lane.b32.xlu0 %v383, 18
        %v557 = vpop.permute.xlu0 %556
        %558 = vrot.lane.b32.xlu0 %v384, 18
        %v559 = vpop.permute.xlu0 %558
        %560 = vrot.lane.b32.xlu0 %v385, 18
        %v561 = vpop.permute.xlu0 %560
        %562 = vrot.lane.b32.xlu0 %v386, 18
        %v563 = vpop.permute.xlu0 %562
        %564 = vrot.lane.b32.xlu0 %v387, 18
        %v565 = vpop.permute.xlu0 %564
        %vm566 = vcmask 146432
        %v567 = vsel %vm566, %v557, %v559
        %v568 = vsel %vm566, %v559, %v561
        %v569 = vsel %vm566, %v561, %v563
        %v570 = vsel %vm566, %v563, %v565
        %575 = vst [vmem:[#allocation2 + $0xe0] sm:$0xff] %v567
        %576 = vst [vmem:[#allocation2 + $0xe8] sm:$0xff] %v568
        %577 = vst [vmem:[#allocation2 + $0xf0] sm:$0xff] %v569
        %578 = vst [vmem:[#allocation2 + $0xf8] sm:$0xff] %v570
        %579 = vrot.lane.b32.xlu0 %v383, 17
        %v580 = vpop.permute.xlu0 %579
        %581 = vrot.lane.b32.xlu0 %v384, 17
        %v582 = vpop.permute.xlu0 %581
        %583 = vrot.lane.b32.xlu0 %v385, 17
        %v584 = vpop.permute.xlu0 %583
        %585 = vrot.lane.b32.xlu0 %v386, 17
        %v586 = vpop.permute.xlu0 %585
        %587 = vrot.lane.b32.xlu0 %v387, 17
        %v588 = vpop.permute.xlu0 %587
        %vm589 = vcmask 138240
        %v590 = vsel %vm589, %v580, %v582
        %v591 = vsel %vm589, %v582, %v584
        %v592 = vsel %vm589, %v584, %v586
        %v593 = vsel %vm589, %v586, %v588
        %598 = vst [vmem:[#allocation2 + $0x100] sm:$0xff] %v590
        %599 = vst [vmem:[#allocation2 + $0x108] sm:$0xff] %v591
        %600 = vst [vmem:[#allocation2 + $0x110] sm:$0xff] %v592
        %601 = vst [vmem:[#allocation2 + $0x118] sm:$0xff] %v593
        %603 = vrot.lane.b32.xlu0 %v384, 67
        %v604 = vpop.permute.xlu0 %603
        %605 = vrot.lane.b32.xlu0 %v385, 67
        %v606 = vpop.permute.xlu0 %605
        %607 = vrot.lane.b32.xlu0 %v386, 67
        %v608 = vpop.permute.xlu0 %607
        %609 = vrot.lane.b32.xlu0 %v387, 67
        %v610 = vpop.permute.xlu0 %609
        %611 = vrot.lane.b32.xlu0 %v388, 67
        %v612 = vpop.permute.xlu0 %611
        %vm613 = vcmask 547840
        %v614 = vsel %vm613, %v604, %v606
        %v615 = vsel %vm613, %v606, %v608
        %v616 = vsel %vm613, %v608, %v610
        %v617 = vsel %vm613, %v610, %v612
        %622 = vst [vmem:[#allocation2 + $0x120] sm:$0xff] %v614
        %623 = vst [vmem:[#allocation2 + $0x128] sm:$0xff] %v615
        %624 = vst [vmem:[#allocation2 + $0x130] sm:$0xff] %v616
        %625 = vst [vmem:[#allocation2 + $0x138] sm:$0xff] %v617
        %626 = vrot.lane.b32.xlu0 %v384, 66
        %v627 = vpop.permute.xlu0 %626
        %628 = vrot.lane.b32.xlu0 %v385, 66
        %v629 = vpop.permute.xlu0 %628
        %630 = vrot.lane.b32.xlu0 %v386, 66
        %v631 = vpop.permute.xlu0 %630
        %632 = vrot.lane.b32.xlu0 %v387, 66
        %v633 = vpop.permute.xlu0 %632
        %634 = vrot.lane.b32.xlu0 %v388, 66
        %v635 = vpop.permute.xlu0 %634
        %vm636 = vcmask 539648
        %v637 = vsel %vm636, %v627, %v629
        %v638 = vsel %vm636, %v629, %v631
        %v639 = vsel %vm636, %v631, %v633
        %v640 = vsel %vm636, %v633, %v635
        %645 = vst [vmem:[#allocation2 + $0x140] sm:$0xff] %v637
        %646 = vst [vmem:[#allocation2 + $0x148] sm:$0xff] %v638
        %647 = vst [vmem:[#allocation2 + $0x150] sm:$0xff] %v639
        %648 = vst [vmem:[#allocation2 + $0x158] sm:$0xff] %v640
        %649 = vrot.lane.b32.xlu0 %v384, 65
        %v650 = vpop.permute.xlu0 %649
        %651 = vrot.lane.b32.xlu0 %v385, 65
        %v652 = vpop.permute.xlu0 %651
        %653 = vrot.lane.b32.xlu0 %v386, 65
        %v654 = vpop.permute.xlu0 %653
        %655 = vrot.lane.b32.xlu0 %v387, 65
        %v656 = vpop.permute.xlu0 %655
        %657 = vrot.lane.b32.xlu0 %v388, 65
        %v658 = vpop.permute.xlu0 %657
        %vm659 = vcmask 531456
        %v660 = vsel %vm659, %v650, %v652
        %v661 = vsel %vm659, %v652, %v654
        %v662 = vsel %vm659, %v654, %v656
        %v663 = vsel %vm659, %v656, %v658
        %668 = vst [vmem:[#allocation2 + $0x160] sm:$0xff] %v660
        %669 = vst [vmem:[#allocation2 + $0x168] sm:$0xff] %v661
        %670 = vst [vmem:[#allocation2 + $0x170] sm:$0xff] %v662
        %671 = vst [vmem:[#allocation2 + $0x178] sm:$0xff] %v663
        %672 = vrot.lane.b32.xlu0 %v384, 57
        %v673 = vpop.permute.xlu0 %672
        %674 = vrot.lane.b32.xlu0 %v385, 57
        %v675 = vpop.permute.xlu0 %674
        %676 = vrot.lane.b32.xlu0 %v386, 57
        %v677 = vpop.permute.xlu0 %676
        %678 = vrot.lane.b32.xlu0 %v387, 57
        %v679 = vpop.permute.xlu0 %678
        %680 = vrot.lane.b32.xlu0 %v388, 57
        %v681 = vpop.permute.xlu0 %680
        %vm682 = vcmask 465920
        %v683 = vsel %vm682, %v673, %v675
        %v684 = vsel %vm682, %v675, %v677
        %v685 = vsel %vm682, %v677, %v679
        %v686 = vsel %vm682, %v679, %v681
        %691 = vst [vmem:[#allocation2 + $0x180] sm:$0xff] %v683
        %692 = vst [vmem:[#allocation2 + $0x188] sm:$0xff] %v684
        %693 = vst [vmem:[#allocation2 + $0x190] sm:$0xff] %v685
        %694 = vst [vmem:[#allocation2 + $0x198] sm:$0xff] %v686
        %695 = vrot.lane.b32.xlu0 %v384, 56
        %v696 = vpop.permute.xlu0 %695
        %697 = vrot.lane.b32.xlu0 %v385, 56
        %v698 = vpop.permute.xlu0 %697
        %699 = vrot.lane.b32.xlu0 %v386, 56
        %v700 = vpop.permute.xlu0 %699
        %701 = vrot.lane.b32.xlu0 %v387, 56
        %v702 = vpop.permute.xlu0 %701
        %703 = vrot.lane.b32.xlu0 %v388, 56
        %v704 = vpop.permute.xlu0 %703
        %vm705 = vcmask 457728
        %v706 = vsel %vm705, %v696, %v698
        %v707 = vsel %vm705, %v698, %v700
        %v708 = vsel %vm705, %v700, %v702
        %v709 = vsel %vm705, %v702, %v704
        %714 = vst [vmem:[#allocation2 + $0x1a0] sm:$0xff] %v706
        %715 = vst [vmem:[#allocation2 + $0x1a8] sm:$0xff] %v707
        %716 = vst [vmem:[#allocation2 + $0x1b0] sm:$0xff] %v708
        %717 = vst [vmem:[#allocation2 + $0x1b8] sm:$0xff] %v709
        %718 = vrot.lane.b32.xlu0 %v384, 55
        %v719 = vpop.permute.xlu0 %718
        %720 = vrot.lane.b32.xlu0 %v385, 55
        %v721 = vpop.permute.xlu0 %720
        %722 = vrot.lane.b32.xlu0 %v386, 55
        %v723 = vpop.permute.xlu0 %722
        %724 = vrot.lane.b32.xlu0 %v387, 55
        %v725 = vpop.permute.xlu0 %724
        %726 = vrot.lane.b32.xlu0 %v388, 55
        %v727 = vpop.permute.xlu0 %726
        %vm728 = vcmask 449536
        %v729 = vsel %vm728, %v719, %v721
        %v730 = vsel %vm728, %v721, %v723
        %v731 = vsel %vm728, %v723, %v725
        %v732 = vsel %vm728, %v725, %v727
        %737 = vst [vmem:[#allocation2 + $0x1c0] sm:$0xff] %v729
        %738 = vst [vmem:[#allocation2 + $0x1c8] sm:$0xff] %v730
        %739 = vst [vmem:[#allocation2 + $0x1d0] sm:$0xff] %v731
        %740 = vst [vmem:[#allocation2 + $0x1d8] sm:$0xff] %v732
        %741 = vrot.lane.b32.xlu0 %v384, 47
        %v742 = vpop.permute.xlu0 %741
        %743 = vrot.lane.b32.xlu0 %v385, 47
        %v744 = vpop.permute.xlu0 %743
        %745 = vrot.lane.b32.xlu0 %v386, 47
        %v746 = vpop.permute.xlu0 %745
        %747 = vrot.lane.b32.xlu0 %v387, 47
        %v748 = vpop.permute.xlu0 %747
        %749 = vrot.lane.b32.xlu0 %v388, 47
        %v750 = vpop.permute.xlu0 %749
        %vm751 = vcmask 384000
        %v752 = vsel %vm751, %v742, %v744
        %v753 = vsel %vm751, %v744, %v746
        %v754 = vsel %vm751, %v746, %v748
        %v755 = vsel %vm751, %v748, %v750
        %760 = vst [vmem:[#allocation2 + $0x1e0] sm:$0xff] %v752
        %761 = vst [vmem:[#allocation2 + $0x1e8] sm:$0xff] %v753
        %762 = vst [vmem:[#allocation2 + $0x1f0] sm:$0xff] %v754
        %763 = vst [vmem:[#allocation2 + $0x1f8] sm:$0xff] %v755
        %764 = vrot.lane.b32.xlu0 %v384, 46
        %v765 = vpop.permute.xlu0 %764
        %766 = vrot.lane.b32.xlu0 %v385, 46
        %v767 = vpop.permute.xlu0 %766
        %768 = vrot.lane.b32.xlu0 %v386, 46
        %v769 = vpop.permute.xlu0 %768
        %770 = vrot.lane.b32.xlu0 %v387, 46
        %v771 = vpop.permute.xlu0 %770
        %772 = vrot.lane.b32.xlu0 %v388, 46
        %v773 = vpop.permute.xlu0 %772
        %vm774 = vcmask 375808
        %v775 = vsel %vm774, %v765, %v767
        %v776 = vsel %vm774, %v767, %v769
        %v777 = vsel %vm774, %v769, %v771
        %v778 = vsel %vm774, %v771, %v773
        %783 = vst [vmem:[#allocation2 + $0x200] sm:$0xff] %v775
        %784 = vst [vmem:[#allocation2 + $0x208] sm:$0xff] %v776
        %785 = vst [vmem:[#allocation2 + $0x210] sm:$0xff] %v777
        %786 = vst [vmem:[#allocation2 + $0x218] sm:$0xff] %v778
        %787 = vrot.lane.b32.xlu0 %v384, 45
        %v788 = vpop.permute.xlu0 %787
        %789 = vrot.lane.b32.xlu0 %v385, 45
        %v790 = vpop.permute.xlu0 %789
        %791 = vrot.lane.b32.xlu0 %v386, 45
        %v792 = vpop.permute.xlu0 %791
        %793 = vrot.lane.b32.xlu0 %v387, 45
        %v794 = vpop.permute.xlu0 %793
        %795 = vrot.lane.b32.xlu0 %v388, 45
        %v796 = vpop.permute.xlu0 %795
        %vm797 = vcmask 367616
        %v798 = vsel %vm797, %v788, %v790
        %v799 = vsel %vm797, %v790, %v792
        %v800 = vsel %vm797, %v792, %v794
        %v801 = vsel %vm797, %v794, %v796
        %806 = vst [vmem:[#allocation2 + $0x220] sm:$0xff] %v798
        %807 = vst [vmem:[#allocation2 + $0x228] sm:$0xff] %v799
        %808 = vst [vmem:[#allocation2 + $0x230] sm:$0xff] %v800
        %809 = vst [vmem:[#allocation2 + $0x238] sm:$0xff] %v801
        %811 = vrot.lane.b32.xlu0 %v385, 95
        %v812 = vpop.permute.xlu0 %811
        %813 = vrot.lane.b32.xlu0 %v386, 95
        %v814 = vpop.permute.xlu0 %813
        %815 = vrot.lane.b32.xlu0 %v387, 95
        %v816 = vpop.permute.xlu0 %815
        %817 = vrot.lane.b32.xlu0 %v388, 95
        %v818 = vpop.permute.xlu0 %817
        %819 = vrot.lane.b32.xlu0 %v389, 95
        %v820 = vpop.permute.xlu0 %819
        %vm821 = vcmask 777216
        %v822 = vsel %vm821, %v812, %v814
        %v823 = vsel %vm821, %v814, %v816
        %v824 = vsel %vm821, %v816, %v818
        %v825 = vsel %vm821, %v818, %v820
        %830 = vst [vmem:[#allocation2 + $0x240] sm:$0xff] %v822
        %831 = vst [vmem:[#allocation2 + $0x248] sm:$0xff] %v823
        %832 = vst [vmem:[#allocation2 + $0x250] sm:$0xff] %v824
        %833 = vst [vmem:[#allocation2 + $0x258] sm:$0xff] %v825
        %834 = vrot.lane.b32.xlu0 %v385, 94
        %v835 = vpop.permute.xlu0 %834
        %836 = vrot.lane.b32.xlu0 %v386, 94
        %v837 = vpop.permute.xlu0 %836
        %838 = vrot.lane.b32.xlu0 %v387, 94
        %v839 = vpop.permute.xlu0 %838
        %840 = vrot.lane.b32.xlu0 %v388, 94
        %v841 = vpop.permute.xlu0 %840
        %842 = vrot.lane.b32.xlu0 %v389, 94
        %v843 = vpop.permute.xlu0 %842
        %vm844 = vcmask 769024
        %v845 = vsel %vm844, %v835, %v837
        %v846 = vsel %vm844, %v837, %v839
        %v847 = vsel %vm844, %v839, %v841
        %v848 = vsel %vm844, %v841, %v843
        %853 = vst [vmem:[#allocation2 + $0x260] sm:$0xff] %v845
        %854 = vst [vmem:[#allocation2 + $0x268] sm:$0xff] %v846
        %855 = vst [vmem:[#allocation2 + $0x270] sm:$0xff] %v847
        %856 = vst [vmem:[#allocation2 + $0x278] sm:$0xff] %v848
        %857 = vrot.lane.b32.xlu0 %v385, 93
        %v858 = vpop.permute.xlu0 %857
        %859 = vrot.lane.b32.xlu0 %v386, 93
        %v860 = vpop.permute.xlu0 %859
        %861 = vrot.lane.b32.xlu0 %v387, 93
        %v862 = vpop.permute.xlu0 %861
        %863 = vrot.lane.b32.xlu0 %v388, 93
        %v864 = vpop.permute.xlu0 %863
        %865 = vrot.lane.b32.xlu0 %v389, 93
        %v866 = vpop.permute.xlu0 %865
        %vm867 = vcmask 760832
        %v868 = vsel %vm867, %v858, %v860
        %v869 = vsel %vm867, %v860, %v862
        %v870 = vsel %vm867, %v862, %v864
        %v871 = vsel %vm867, %v864, %v866
        %876 = vst [vmem:[#allocation2 + $0x280] sm:$0xff] %v868
        %877 = vst [vmem:[#allocation2 + $0x288] sm:$0xff] %v869
        %878 = vst [vmem:[#allocation2 + $0x290] sm:$0xff] %v870
        %879 = vst [vmem:[#allocation2 + $0x298] sm:$0xff] %v871
        %880 = vrot.lane.b32.xlu0 %v385, 85
        %v881 = vpop.permute.xlu0 %880
        %882 = vrot.lane.b32.xlu0 %v386, 85
        %v883 = vpop.permute.xlu0 %882
        %884 = vrot.lane.b32.xlu0 %v387, 85
        %v885 = vpop.permute.xlu0 %884
        %886 = vrot.lane.b32.xlu0 %v388, 85
        %v887 = vpop.permute.xlu0 %886
        %888 = vrot.lane.b32.xlu0 %v389, 85
        %v889 = vpop.permute.xlu0 %888
        %vm890 = vcmask 695296
        %v891 = vsel %vm890, %v881, %v883
        %v892 = vsel %vm890, %v883, %v885
        %v893 = vsel %vm890, %v885, %v887
        %v894 = vsel %vm890, %v887, %v889
        %899 = vst [vmem:[#allocation2 + $0x2a0] sm:$0xff] %v891
        %900 = vst [vmem:[#allocation2 + $0x2a8] sm:$0xff] %v892
        %901 = vst [vmem:[#allocation2 + $0x2b0] sm:$0xff] %v893
        %902 = vst [vmem:[#allocation2 + $0x2b8] sm:$0xff] %v894
        %903 = vrot.lane.b32.xlu0 %v385, 84
        %v904 = vpop.permute.xlu0 %903
        %905 = vrot.lane.b32.xlu0 %v386, 84
        %v906 = vpop.permute.xlu0 %905
        %907 = vrot.lane.b32.xlu0 %v387, 84
        %v908 = vpop.permute.xlu0 %907
        %909 = vrot.lane.b32.xlu0 %v388, 84
        %v910 = vpop.permute.xlu0 %909
        %911 = vrot.lane.b32.xlu0 %v389, 84
        %v912 = vpop.permute.xlu0 %911
        %vm913 = vcmask 687104
        %v914 = vsel %vm913, %v904, %v906
        %v915 = vsel %vm913, %v906, %v908
        %v916 = vsel %vm913, %v908, %v910
        %v917 = vsel %vm913, %v910, %v912
        %922 = vst [vmem:[#allocation2 + $0x2c0] sm:$0xff] %v914
        %923 = vst [vmem:[#allocation2 + $0x2c8] sm:$0xff] %v915
        %924 = vst [vmem:[#allocation2 + $0x2d0] sm:$0xff] %v916
        %925 = vst [vmem:[#allocation2 + $0x2d8] sm:$0xff] %v917
        %926 = vrot.lane.b32.xlu0 %v385, 83
        %v927 = vpop.permute.xlu0 %926
        %928 = vrot.lane.b32.xlu0 %v386, 83
        %v929 = vpop.permute.xlu0 %928
        %930 = vrot.lane.b32.xlu0 %v387, 83
        %v931 = vpop.permute.xlu0 %930
        %932 = vrot.lane.b32.xlu0 %v388, 83
        %v933 = vpop.permute.xlu0 %932
        %934 = vrot.lane.b32.xlu0 %v389, 83
        %v935 = vpop.permute.xlu0 %934
        %vm936 = vcmask 678912
        %v937 = vsel %vm936, %v927, %v929
        %v938 = vsel %vm936, %v929, %v931
        %v939 = vsel %vm936, %v931, %v933
        %v940 = vsel %vm936, %v933, %v935
        %945 = vst [vmem:[#allocation2 + $0x2e0] sm:$0xff] %v937
        %946 = vst [vmem:[#allocation2 + $0x2e8] sm:$0xff] %v938
        %947 = vst [vmem:[#allocation2 + $0x2f0] sm:$0xff] %v939
        %948 = vst [vmem:[#allocation2 + $0x2f8] sm:$0xff] %v940
        %949 = vrot.lane.b32.xlu0 %v385, 75
        %v950 = vpop.permute.xlu0 %949
        %951 = vrot.lane.b32.xlu0 %v386, 75
        %v952 = vpop.permute.xlu0 %951
        %953 = vrot.lane.b32.xlu0 %v387, 75
        %v954 = vpop.permute.xlu0 %953
        %955 = vrot.lane.b32.xlu0 %v388, 75
        %v956 = vpop.permute.xlu0 %955
        %957 = vrot.lane.b32.xlu0 %v389, 75
        %v958 = vpop.permute.xlu0 %957
        %vm959 = vcmask 613376
        %v960 = vsel %vm959, %v950, %v952
        %v961 = vsel %vm959, %v952, %v954
        %v962 = vsel %vm959, %v954, %v956
        %v963 = vsel %vm959, %v956, %v958
        %968 = vst [vmem:[#allocation2 + $0x300] sm:$0xff] %v960
        %969 = vst [vmem:[#allocation2 + $0x308] sm:$0xff] %v961
        %970 = vst [vmem:[#allocation2 + $0x310] sm:$0xff] %v962
        %971 = vst [vmem:[#allocation2 + $0x318] sm:$0xff] %v963
        %972 = vrot.lane.b32.xlu0 %v385, 74
        %v973 = vpop.permute.xlu0 %972
        %974 = vrot.lane.b32.xlu0 %v386, 74
        %v975 = vpop.permute.xlu0 %974
        %976 = vrot.lane.b32.xlu0 %v387, 74
        %v977 = vpop.permute.xlu0 %976
        %978 = vrot.lane.b32.xlu0 %v388, 74
        %v979 = vpop.permute.xlu0 %978
        %980 = vrot.lane.b32.xlu0 %v389, 74
        %v981 = vpop.permute.xlu0 %980
        %vm982 = vcmask 605184
        %v983 = vsel %vm982, %v973, %v975
        %v984 = vsel %vm982, %v975, %v977
        %v985 = vsel %vm982, %v977, %v979
        %v986 = vsel %vm982, %v979, %v981
        %991 = vst [vmem:[#allocation2 + $0x320] sm:$0xff] %v983
        %992 = vst [vmem:[#allocation2 + $0x328] sm:$0xff] %v984
        %993 = vst [vmem:[#allocation2 + $0x330] sm:$0xff] %v985
        %994 = vst [vmem:[#allocation2 + $0x338] sm:$0xff] %v986
        %995 = vrot.lane.b32.xlu0 %v385, 73
        %v996 = vpop.permute.xlu0 %995
        %997 = vrot.lane.b32.xlu0 %v386, 73
        %v998 = vpop.permute.xlu0 %997
        %999 = vrot.lane.b32.xlu0 %v387, 73
        %v1000 = vpop.permute.xlu0 %999
        %1001 = vrot.lane.b32.xlu0 %v388, 73
        %v1002 = vpop.permute.xlu0 %1001
        %1003 = vrot.lane.b32.xlu0 %v389, 73
        %v1004 = vpop.permute.xlu0 %1003
        %vm1005 = vcmask 596992
        %v1006 = vsel %vm1005, %v996, %v998
        %v1007 = vsel %vm1005, %v998, %v1000
        %v1008 = vsel %vm1005, %v1000, %v1002
        %v1009 = vsel %vm1005, %v1002, %v1004
        %1014 = vst [vmem:[#allocation2 + $0x340] sm:$0xff] %v1006
        %1015 = vst [vmem:[#allocation2 + $0x348] sm:$0xff] %v1007
        %1016 = vst [vmem:[#allocation2 + $0x350] sm:$0xff] %v1008
        %1017 = vst [vmem:[#allocation2 + $0x358] sm:$0xff] %v1009
        %v1018 = vld [vmem:[%s2] sm:$0xff]
        %v1019 = vld [vmem:[%s2 + $0x8] sm:$0xff]
        %v1020 = vld [vmem:[%s2 + $0x10] sm:$0x1]
        %v1021 = vld [vmem:[%s2 + $0x18] sm:$0x1]
        %v1022 = vld [vmem:[#allocation2] sm:$0xff]
        %v1023 = vld [vmem:[#allocation2 + $0x8] sm:$0xff]
        %v1024 = vld [vmem:[#allocation2 + $0x10] sm:$0xff]
        %v1025 = vld [vmem:[#allocation2 + $0x18] sm:$0xff]
        %v1026 = vld [vmem:[#allocation2 + $0x20] sm:$0xff]
        %v1027 = vld [vmem:[#allocation2 + $0x28] sm:$0xff]
        %v1028 = vld [vmem:[#allocation2 + $0x30] sm:$0xff]
        %v1029 = vld [vmem:[#allocation2 + $0x38] sm:$0xff]
        %v1030 = vld [vmem:[#allocation2 + $0x40] sm:$0xff]
        %v1031 = vld [vmem:[#allocation2 + $0x48] sm:$0xff]
        %v1032 = vld [vmem:[#allocation2 + $0x50] sm:$0xff]
        %v1033 = vld [vmem:[#allocation2 + $0x58] sm:$0xff]
        %v1034 = vld [vmem:[#allocation2 + $0x60] sm:$0xff]
        %v1035 = vld [vmem:[#allocation2 + $0x68] sm:$0xff]
        %v1036 = vld [vmem:[#allocation2 + $0x70] sm:$0xff]
        %v1037 = vld [vmem:[#allocation2 + $0x78] sm:$0xff]
        %v1038 = vld [vmem:[#allocation2 + $0x80] sm:$0xff]
        %v1039 = vld [vmem:[#allocation2 + $0x88] sm:$0xff]
        %v1040 = vld [vmem:[#allocation2 + $0x90] sm:$0xff]
        %v1041 = vld [vmem:[#allocation2 + $0x98] sm:$0xff]
        %v1042 = vld [vmem:[#allocation2 + $0xa0] sm:$0xff]
        %v1043 = vld [vmem:[#allocation2 + $0xa8] sm:$0xff]
        %v1044 = vld [vmem:[#allocation2 + $0xb0] sm:$0xff]
        %v1045 = vld [vmem:[#allocation2 + $0xb8] sm:$0xff]
        %v1046 = vld [vmem:[#allocation2 + $0xc0] sm:$0xff]
        %v1047 = vld [vmem:[#allocation2 + $0xc8] sm:$0xff]
        %v1048 = vld [vmem:[#allocation2 + $0xd0] sm:$0xff]
        %v1049 = vld [vmem:[#allocation2 + $0xd8] sm:$0xff]
        %v1050 = vld [vmem:[#allocation2 + $0xe0] sm:$0xff]
        %v1051 = vld [vmem:[#allocation2 + $0xe8] sm:$0xff]
        %v1052 = vld [vmem:[#allocation2 + $0xf0] sm:$0xff]
        %v1053 = vld [vmem:[#allocation2 + $0xf8] sm:$0xff]
        %v1054 = vld [vmem:[#allocation2 + $0x100] sm:$0xff]
        %v1055 = vld [vmem:[#allocation2 + $0x108] sm:$0xff]
        %v1056 = vld [vmem:[#allocation2 + $0x110] sm:$0xff]
        %v1057 = vld [vmem:[#allocation2 + $0x118] sm:$0xff]
        %v1058 = vld [vmem:[#allocation2 + $0x120] sm:$0xff]
        %v1059 = vld [vmem:[#allocation2 + $0x128] sm:$0xff]
        %v1060 = vld [vmem:[#allocation2 + $0x130] sm:$0xff]
        %v1061 = vld [vmem:[#allocation2 + $0x138] sm:$0xff]
        %v1062 = vld [vmem:[#allocation2 + $0x140] sm:$0xff]
        %v1063 = vld [vmem:[#allocation2 + $0x148] sm:$0xff]
        %v1064 = vld [vmem:[#allocation2 + $0x150] sm:$0xff]
        %v1065 = vld [vmem:[#allocation2 + $0x158] sm:$0xff]
        %v1066 = vld [vmem:[#allocation2 + $0x160] sm:$0xff]
        %v1067 = vld [vmem:[#allocation2 + $0x168] sm:$0xff]
        %v1068 = vld [vmem:[#allocation2 + $0x170] sm:$0xff]
        %v1069 = vld [vmem:[#allocation2 + $0x178] sm:$0xff]
        %v1070 = vld [vmem:[#allocation2 + $0x180] sm:$0xff]
        %v1071 = vld [vmem:[#allocation2 + $0x188] sm:$0xff]
        %v1072 = vld [vmem:[#allocation2 + $0x190] sm:$0xff]
        %v1073 = vld [vmem:[#allocation2 + $0x198] sm:$0xff]
        %v1074 = vld [vmem:[#allocation2 + $0x1a0] sm:$0xff]
        %v1075 = vld [vmem:[#allocation2 + $0x1a8] sm:$0xff]
        %v1076 = vld [vmem:[#allocation2 + $0x1b0] sm:$0xff]
        %v1077 = vld [vmem:[#allocation2 + $0x1b8] sm:$0xff]
        %v1078 = vld [vmem:[#allocation2 + $0x1c0] sm:$0xff]
        %v1079 = vld [vmem:[#allocation2 + $0x1c8] sm:$0xff]
        %v1080 = vld [vmem:[#allocation2 + $0x1d0] sm:$0xff]
        %v1081 = vld [vmem:[#allocation2 + $0x1d8] sm:$0xff]
        %v1082 = vld [vmem:[#allocation2 + $0x1e0] sm:$0xff]
        %v1083 = vld [vmem:[#allocation2 + $0x1e8] sm:$0xff]
        %v1084 = vld [vmem:[#allocation2 + $0x1f0] sm:$0xff]
        %v1085 = vld [vmem:[#allocation2 + $0x1f8] sm:$0xff]
        %v1086 = vld [vmem:[#allocation2 + $0x200] sm:$0xff]
        %v1087 = vld [vmem:[#allocation2 + $0x208] sm:$0xff]
        %v1088 = vld [vmem:[#allocation2 + $0x210] sm:$0xff]
        %v1089 = vld [vmem:[#allocation2 + $0x218] sm:$0xff]
        %v1090 = vld [vmem:[#allocation2 + $0x220] sm:$0xff]
        %v1091 = vld [vmem:[#allocation2 + $0x228] sm:$0xff]
        %v1092 = vld [vmem:[#allocation2 + $0x230] sm:$0xff]
        %v1093 = vld [vmem:[#allocation2 + $0x238] sm:$0xff]
        %v1094 = vld [vmem:[#allocation2 + $0x240] sm:$0xff]
        %v1095 = vld [vmem:[#allocation2 + $0x248] sm:$0xff]
        %v1096 = vld [vmem:[#allocation2 + $0x250] sm:$0xff]
        %v1097 = vld [vmem:[#allocation2 + $0x258] sm:$0xff]
        %v1098 = vld [vmem:[#allocation2 + $0x260] sm:$0xff]
        %v1099 = vld [vmem:[#allocation2 + $0x268] sm:$0xff]
        %v1100 = vld [vmem:[#allocation2 + $0x270] sm:$0xff]
        %v1101 = vld [vmem:[#allocation2 + $0x278] sm:$0xff]
        %v1102 = vld [vmem:[#allocation2 + $0x280] sm:$0xff]
        %v1103 = vld [vmem:[#allocation2 + $0x288] sm:$0xff]
        %v1104 = vld [vmem:[#allocation2 + $0x290] sm:$0xff]
        %v1105 = vld [vmem:[#allocation2 + $0x298] sm:$0xff]
        %v1106 = vld [vmem:[#allocation2 + $0x2a0] sm:$0xff]
        %v1107 = vld [vmem:[#allocation2 + $0x2a8] sm:$0xff]
        %v1108 = vld [vmem:[#allocation2 + $0x2b0] sm:$0xff]
        %v1109 = vld [vmem:[#allocation2 + $0x2b8] sm:$0xff]
        %v1110 = vld [vmem:[#allocation2 + $0x2c0] sm:$0xff]
        %v1111 = vld [vmem:[#allocation2 + $0x2c8] sm:$0xff]
        %v1112 = vld [vmem:[#allocation2 + $0x2d0] sm:$0xff]
        %v1113 = vld [vmem:[#allocation2 + $0x2d8] sm:$0xff]
        %v1114 = vld [vmem:[#allocation2 + $0x2e0] sm:$0xff]
        %v1115 = vld [vmem:[#allocation2 + $0x2e8] sm:$0xff]
        %v1116 = vld [vmem:[#allocation2 + $0x2f0] sm:$0xff]
        %v1117 = vld [vmem:[#allocation2 + $0x2f8] sm:$0xff]
        %v1118 = vld [vmem:[#allocation2 + $0x300] sm:$0xff]
        %v1119 = vld [vmem:[#allocation2 + $0x308] sm:$0xff]
        %v1120 = vld [vmem:[#allocation2 + $0x310] sm:$0xff]
        %v1121 = vld [vmem:[#allocation2 + $0x318] sm:$0xff]
        %v1122 = vld [vmem:[#allocation2 + $0x320] sm:$0xff]
        %v1123 = vld [vmem:[#allocation2 + $0x328] sm:$0xff]
        %v1124 = vld [vmem:[#allocation2 + $0x330] sm:$0xff]
        %v1125 = vld [vmem:[#allocation2 + $0x338] sm:$0xff]
        %v1126 = vld [vmem:[#allocation2 + $0x340] sm:$0xff]
        %v1127 = vld [vmem:[#allocation2 + $0x348] sm:$0xff]
        %v1128 = vld [vmem:[#allocation2 + $0x350] sm:$0xff]
        %v1129 = vld [vmem:[#allocation2 + $0x358] sm:$0xff]
        %vm1130 = vcmask 719872
        %v1132 = vsel %vm1130, %v1019, 0
        %v1135 = vsel %vm1130, %v1021, 0
        %1137 = vmatprep.subr.mxu0 %v1023
        %1138 = vmatpush1.msra.mxu0 %v1022
        %1139 = vmatprep.subr.mxu0 %v1027
        %1140 = vmatpush1.msra.mxu0 %v1026
        %1141 = vmatprep.subr.mxu0 %v1031
        %1142 = vmatpush1.msra.mxu0 %v1030
        %1143 = vmatprep.subr.mxu0 %v1035
        %1144 = vmatpush1.msra.mxu0 %v1034
        %1145 = vmatprep.subr.mxu0 %v1039
        %1146 = vmatpush1.msra.mxu0 %v1038
        %1147 = vmatprep.subr.mxu0 %v1043
        %1148 = vmatpush1.msra.mxu0 %v1042
        %1149 = vmatprep.subr.mxu0 %v1047
        %1150 = vmatpush1.msra.mxu0 %v1046
        %1151 = vmatprep.subr.mxu0 %v1051
        %1152 = vmatpush1.msra.mxu0 %v1050
        %1153 = vmatprep.subr.mxu0 %v1055
        %1154 = vmatpush1.msra.mxu0 %v1054
        %1155 = vmatprep.subr.mxu0 %v1059
        %1156 = vmatpush1.msra.mxu0 %v1058
        %1157 = vmatprep.subr.mxu0 %v1063
        %1158 = vmatpush1.msra.mxu0 %v1062
        %1159 = vmatprep.subr.mxu0 %v1067
        %1160 = vmatpush1.msra.mxu0 %v1066
        %1161 = vmatprep.subr.mxu0 %v1071
        %1162 = vmatpush1.msra.mxu0 %v1070
        %1163 = vmatprep.subr.mxu0 %v1075
        %1164 = vmatpush1.msra.mxu0 %v1074
        %1165 = vmatprep.subr.mxu0 %v1079
        %1166 = vmatpush1.msra.mxu0 %v1078
        %1167 = vmatprep.subr.mxu0 %v1083
        %1168 = vmatpush1.msra.mxu0 %v1082
        %1169 = vmatprep.subr.mxu0 %v1087
        %1170 = vmatpush1.msra.mxu0 %v1086
        %1171 = vmatprep.subr.mxu0 %v1091
        %1172 = vmatpush1.msra.mxu0 %v1090
        %1173 = vmatprep.subr.mxu0 %v1095
        %1174 = vmatpush1.msra.mxu0 %v1094
        %1175 = vmatprep.subr.mxu0 %v1099
        %1176 = vmatpush1.msra.mxu0 %v1098
        %1177 = vmatprep.subr.mxu0 %v1103
        %1178 = vmatpush1.msra.mxu0 %v1102
        %1179 = vmatprep.subr.mxu0 %v1107
        %1180 = vmatpush1.msra.mxu0 %v1106
        %1181 = vmatprep.subr.mxu0 %v1111
        %1182 = vmatpush1.msra.mxu0 %v1110
        %1183 = vmatprep.subr.mxu0 %v1115
        %1184 = vmatpush1.msra.mxu0 %v1114
        %1185 = vmatprep.subr.mxu0 %v1119
        %1186 = vmatpush1.msra.mxu0 %v1118
        %1187 = vmatprep.subr.mxu0 %v1123
        %1188 = vmatpush1.msra.mxu0 %v1122
        %1189 = vmatprep.subr.mxu0 %v1127
        %1190 = vmatpush1.msra.mxu0 %v1126
        %1191 = vmatprep.subr.mxu0 0.0
        %1192 = vmatpush1.msra.mxu0 0.0
        %1193 = vmatprep.subr.mxu0 0.0
        %1194 = vmatpush1.msra.mxu0 0.0
        %1195 = vmatprep.subr.mxu0 0.0
        %1196 = vmatpush1.msra.mxu0 0.0
        %1197 = vmatprep.subr.mxu0 0.0
        %1198 = vmatpush1.msra.mxu0 0.0
        %1199 = vmatprep.subr.mxu0 0.0
        %1200 = vmatpush1.msra.mxu0 0.0
        %1201 = vmatprep.mubr.f32.mxu0 %v1132
        %1202 = vmatmul.mubr.f32.gmra.mrb[0].mxu0 %v1018
        %v1203 = vpop.f32.mrb[0].mxu0
        %v1204 = vadd.f32 0.0, %v1203
        %v1205 = vpop.f32.mrb[0].mxu0
        %v1206 = vadd.f32 0.0, %v1205
        %1207 = vmatprep.mubr.f32.mxu0 %v1135
        %1208 = vmatmul.mubr.f32.gmra.mrb[0].mxu0 %v1020
        %v1209 = vpop.f32.mrb[0].mxu0
        %v1210 = vadd.f32 0.0, %v1209
        %v1211 = vpop.f32.mrb[0].mxu0
        %v1212 = vadd.f32 0.0, %v1211
        %1213 = vdwg.mxu0
        %1214 = vmatprep.subr.mxu0 %v1025
        %1215 = vmatpush1.msra.mxu0 %v1024
        %1216 = vmatprep.subr.mxu0 %v1029
        %1217 = vmatpush1.msra.mxu0 %v1028
        %1218 = vmatprep.subr.mxu0 %v1033
        %1219 = vmatpush1.msra.mxu0 %v1032
        %1220 = vmatprep.subr.mxu0 %v1037
        %1221 = vmatpush1.msra.mxu0 %v1036
        %1222 = vmatprep.subr.mxu0 %v1041
        %1223 = vmatpush1.msra.mxu0 %v1040
        %1224 = vmatprep.subr.mxu0 %v1045
        %1225 = vmatpush1.msra.mxu0 %v1044
        %1226 = vmatprep.subr.mxu0 %v1049
        %1227 = vmatpush1.msra.mxu0 %v1048
        %1228 = vmatprep.subr.mxu0 %v1053
        %1229 = vmatpush1.msra.mxu0 %v1052
        %1230 = vmatprep.subr.mxu0 %v1057
        %1231 = vmatpush1.msra.mxu0 %v1056
        %1232 = vmatprep.subr.mxu0 %v1061
        %1233 = vmatpush1.msra.mxu0 %v1060
        %1234 = vmatprep.subr.mxu0 %v1065
        %1235 = vmatpush1.msra.mxu0 %v1064
        %1236 = vmatprep.subr.mxu0 %v1069
        %1237 = vmatpush1.msra.mxu0 %v1068
        %1238 = vmatprep.subr.mxu0 %v1073
        %1239 = vmatpush1.msra.mxu0 %v1072
        %1240 = vmatprep.subr.mxu0 %v1077
        %1241 = vmatpush1.msra.mxu0 %v1076
        %1242 = vmatprep.subr.mxu0 %v1081
        %1243 = vmatpush1.msra.mxu0 %v1080
        %1244 = vmatprep.subr.mxu0 %v1085
        %1245 = vmatpush1.msra.mxu0 %v1084
        %1246 = vmatprep.subr.mxu0 %v1089
        %1247 = vmatpush1.msra.mxu0 %v1088
        %1248 = vmatprep.subr.mxu0 %v1093
        %1249 = vmatpush1.msra.mxu0 %v1092
        %1250 = vmatprep.subr.mxu0 %v1097
        %1251 = vmatpush1.msra.mxu0 %v1096
        %1252 = vmatprep.subr.mxu0 %v1101
        %1253 = vmatpush1.msra.mxu0 %v1100
        %1254 = vmatprep.subr.mxu0 %v1105
        %1255 = vmatpush1.msra.mxu0 %v1104
        %1256 = vmatprep.subr.mxu0 %v1109
        %1257 = vmatpush1.msra.mxu0 %v1108
        %1258 = vmatprep.subr.mxu0 %v1113
        %1259 = vmatpush1.msra.mxu0 %v1112
        %1260 = vmatprep.subr.mxu0 %v1117
        %1261 = vmatpush1.msra.mxu0 %v1116
        %1262 = vmatprep.subr.mxu0 %v1121
        %1263 = vmatpush1.msra.mxu0 %v1120
        %1264 = vmatprep.subr.mxu0 %v1125
        %1265 = vmatpush1.msra.mxu0 %v1124
        %1266 = vmatprep.subr.mxu0 %v1129
        %1267 = vmatpush1.msra.mxu0 %v1128
        %1268 = vmatprep.subr.mxu0 0.0
        %1269 = vmatpush1.msra.mxu0 0.0
        %1270 = vmatprep.subr.mxu0 0.0
        %1271 = vmatpush1.msra.mxu0 0.0
        %1272 = vmatprep.subr.mxu0 0.0
        %1273 = vmatpush1.msra.mxu0 0.0
        %1274 = vmatprep.subr.mxu0 0.0
        %1275 = vmatpush1.msra.mxu0 0.0
        %1276 = vmatprep.subr.mxu0 0.0
        %1277 = vmatpush1.msra.mxu0 0.0
        %1278 = vmatprep.mubr.f32.mxu0 %v1132
        %1279 = vmatmul.mubr.f32.gmra.mrb[0].mxu0 %v1018
        %v1280 = vpop.f32.mrb[0].mxu0
        %v1281 = vadd.f32 0.0, %v1280
        %v1282 = vpop.f32.mrb[0].mxu0
        %v1283 = vadd.f32 0.0, %v1282
        %1284 = vmatprep.mubr.f32.mxu0 %v1135
        %1285 = vmatmul.mubr.f32.gmra.mrb[0].mxu0 %v1020
        %v1286 = vpop.f32.mrb[0].mxu0
        %v1287 = vadd.f32 0.0, %v1286
        %v1288 = vpop.f32.mrb[0].mxu0
        %v1289 = vadd.f32 0.0, %v1288
        %1290 = vdwg.mxu0
        %v1291 = vmul.f32 %v383, %v383
        %v1292 = vmul.f32 %v384, %v384
        %v1293 = vmul.f32 %v385, %v385
        %v1294 = vmul.f32 %v386, %v386
        %v1295 = vmul.f32 %v387, %v387
        %v1296 = vmul.f32 %v388, %v388
        %v1297 = vmul.f32 %v389, %v389
        %vm1298 = vcmask 1048264
        %v1299 = vsel %vm1298, %v1291, 0.0
        %v1300 = vrot.slane %v1299, 4
        %v1301 = vadd.f32 %v1299, %v1300
        %v1302 = vrot.slane %v1301, 2
        %v1303 = vadd.f32 %v1301, %v1302
        %v1304 = vrot.slane %v1303, 1
        %v1305 = vadd.f32 %v1303, %v1304
        %v1306 = vrot.slane %v1292, 4
        %v1307 = vadd.f32 %v1292, %v1306
        %v1308 = vrot.slane %v1307, 2
        %v1309 = vadd.f32 %v1307, %v1308
        %v1310 = vrot.slane %v1309, 1
        %v1311 = vadd.f32 %v1309, %v1310
        %v1312 = vrot.slane %v1293, 4
        %v1313 = vadd.f32 %v1293, %v1312
        %v1314 = vrot.slane %v1313, 2
        %v1315 = vadd.f32 %v1313, %v1314
        %v1316 = vrot.slane %v1315, 1
        %v1317 = vadd.f32 %v1315, %v1316
        %v1318 = vrot.slane %v1294, 4
        %v1319 = vadd.f32 %v1294, %v1318
        %v1320 = vrot.slane %v1319, 2
        %v1321 = vadd.f32 %v1319, %v1320
        %v1322 = vrot.slane %v1321, 1
        %v1323 = vadd.f32 %v1321, %v1322
        %v1324 = vrot.slane %v1295, 4
        %v1325 = vadd.f32 %v1295, %v1324
        %v1326 = vrot.slane %v1325, 2
        %v1327 = vadd.f32 %v1325, %v1326
        %v1328 = vrot.slane %v1327, 1
        %v1329 = vadd.f32 %v1327, %v1328
        %v1330 = vrot.slane %v1296, 4
        %v1331 = vadd.f32 %v1296, %v1330
        %v1332 = vrot.slane %v1331, 2
        %v1333 = vadd.f32 %v1331, %v1332
        %v1334 = vrot.slane %v1333, 1
        %v1335 = vadd.f32 %v1333, %v1334
        %v1336 = vsel %vm728, %v1297, 0.0
        %v1337 = vrot.slane %v1336, 4
        %v1338 = vadd.f32 %v1336, %v1337
        %v1339 = vrot.slane %v1338, 2
        %v1340 = vadd.f32 %v1338, %v1339
        %v1341 = vrot.slane %v1340, 1
        %v1342 = vadd.f32 %v1340, %v1341
        %1350 = vrot.lane.b32.xlu0 %v1305, 127
        %v1351 = vpop.permute.xlu0 %1350
        %1352 = vrot.lane.b32.xlu0 %v1311, 127
        %v1353 = vpop.permute.xlu0 %1352
        %1354 = vrot.lane.b32.xlu0 %v1317, 127
        %v1355 = vpop.permute.xlu0 %1354
        %1356 = vrot.lane.b32.xlu0 %v1323, 127
        %v1357 = vpop.permute.xlu0 %1356
        %1358 = vrot.lane.b32.xlu0 %v1329, 127
        %v1359 = vpop.permute.xlu0 %1358
        %1360 = vrot.lane.b32.xlu0 %v1335, 127
        %v1361 = vpop.permute.xlu0 %1360
        %1362 = vrot.lane.b32.xlu0 %v1342, 127
        %v1363 = vpop.permute.xlu0 %1362
        %vm1364 = vcmask 1039360
        %v1365 = vsel %vm1364, %v1351, %v1353
        %v1366 = vsel %vm1364, %v1353, %v1355
        %v1367 = vsel %vm1364, %v1355, %v1357
        %v1368 = vsel %vm1364, %v1357, %v1359
        %v1369 = vsel %vm1364, %v1359, %v1361
        %v1370 = vsel %vm1364, %v1361, %v1363
        %v1378 = vadd.f32 %v1305, %v1365
        %v1379 = vadd.f32 %v1311, %v1366
        %v1380 = vadd.f32 %v1317, %v1367
        %v1381 = vadd.f32 %v1323, %v1368
        %v1382 = vadd.f32 %v1329, %v1369
        %v1383 = vadd.f32 %v1335, %v1370
        %v1384 = vadd.f32 %v1342, %v1363
        %1385 = vrot.lane.b32.xlu0 %v1305, 126
        %v1386 = vpop.permute.xlu0 %1385
        %1387 = vrot.lane.b32.xlu0 %v1311, 126
        %v1388 = vpop.permute.xlu0 %1387
        %1389 = vrot.lane.b32.xlu0 %v1317, 126
        %v1390 = vpop.permute.xlu0 %1389
        %1391 = vrot.lane.b32.xlu0 %v1323, 126
        %v1392 = vpop.permute.xlu0 %1391
        %1393 = vrot.lane.b32.xlu0 %v1329, 126
        %v1394 = vpop.permute.xlu0 %1393
        %1395 = vrot.lane.b32.xlu0 %v1335, 126
        %v1396 = vpop.permute.xlu0 %1395
        %1397 = vrot.lane.b32.xlu0 %v1342, 126
        %v1398 = vpop.permute.xlu0 %1397
        %vm1399 = vcmask 1031168
        %v1400 = vsel %vm1399, %v1386, %v1388
        %v1401 = vsel %vm1399, %v1388, %v1390
        %v1402 = vsel %vm1399, %v1390, %v1392
        %v1403 = vsel %vm1399, %v1392, %v1394
        %v1404 = vsel %vm1399, %v1394, %v1396
        %v1405 = vsel %vm1399, %v1396, %v1398
        %v1413 = vadd.f32 %v1378, %v1400
        %v1414 = vadd.f32 %v1379, %v1401
        %v1415 = vadd.f32 %v1380, %v1402
        %v1416 = vadd.f32 %v1381, %v1403
        %v1417 = vadd.f32 %v1382, %v1404
        %v1418 = vadd.f32 %v1383, %v1405
        %v1419 = vadd.f32 %v1384, %v1398
        %1427 = vrot.lane.b32.xlu0 %v1413, 118
        %v1428 = vpop.permute.xlu0 %1427
        %1429 = vrot.lane.b32.xlu0 %v1414, 118
        %v1430 = vpop.permute.xlu0 %1429
        %1431 = vrot.lane.b32.xlu0 %v1415, 118
        %v1432 = vpop.permute.xlu0 %1431
        %1433 = vrot.lane.b32.xlu0 %v1416, 118
        %v1434 = vpop.permute.xlu0 %1433
        %1435 = vrot.lane.b32.xlu0 %v1417, 118
        %v1436 = vpop.permute.xlu0 %1435
        %1437 = vrot.lane.b32.xlu0 %v1418, 118
        %v1438 = vpop.permute.xlu0 %1437
        %1439 = vrot.lane.b32.xlu0 %v1419, 118
        %v1440 = vpop.permute.xlu0 %1439
        %vm1441 = vcmask 965632
        %v1442 = vsel %vm1441, %v1428, %v1430
        %v1443 = vsel %vm1441, %v1430, %v1432
        %v1444 = vsel %vm1441, %v1432, %v1434
        %v1445 = vsel %vm1441, %v1434, %v1436
        %v1446 = vsel %vm1441, %v1436, %v1438
        %v1447 = vsel %vm1441, %v1438, %v1440
        %v1455 = vadd.f32 %v1413, %v1442
        %v1456 = vadd.f32 %v1414, %v1443
        %v1457 = vadd.f32 %v1415, %v1444
        %v1458 = vadd.f32 %v1416, %v1445
        %v1459 = vadd.f32 %v1417, %v1446
        %v1460 = vadd.f32 %v1418, %v1447
        %v1461 = vadd.f32 %v1419, %v1440
        %1462 = vrot.lane.b32.xlu0 %v1413, 108
        %v1463 = vpop.permute.xlu0 %1462
        %1464 = vrot.lane.b32.xlu0 %v1414, 108
        %v1465 = vpop.permute.xlu0 %1464
        %1466 = vrot.lane.b32.xlu0 %v1415, 108
        %v1467 = vpop.permute.xlu0 %1466
        %1468 = vrot.lane.b32.xlu0 %v1416, 108
        %v1469 = vpop.permute.xlu0 %1468
        %1470 = vrot.lane.b32.xlu0 %v1417, 108
        %v1471 = vpop.permute.xlu0 %1470
        %1472 = vrot.lane.b32.xlu0 %v1418, 108
        %v1473 = vpop.permute.xlu0 %1472
        %1474 = vrot.lane.b32.xlu0 %v1419, 108
        %v1475 = vpop.permute.xlu0 %1474
        %vm1476 = vcmask 883712
        %v1477 = vsel %vm1476, %v1463, %v1465
        %v1478 = vsel %vm1476, %v1465, %v1467
        %v1479 = vsel %vm1476, %v1467, %v1469
        %v1480 = vsel %vm1476, %v1469, %v1471
        %v1481 = vsel %vm1476, %v1471, %v1473
        %v1482 = vsel %vm1476, %v1473, %v1475
        %v1490 = vadd.f32 %v1455, %v1477
        %v1491 = vadd.f32 %v1456, %v1478
        %v1492 = vadd.f32 %v1457, %v1479
        %v1493 = vadd.f32 %v1458, %v1480
        %v1494 = vadd.f32 %v1459, %v1481
        %v1495 = vadd.f32 %v1460, %v1482
        %v1496 = vadd.f32 %v1461, %v1475
        %1502 = vrot.lane.b32.xlu0 %v1491, 28
        %v1503 = vpop.permute.xlu0 %1502
        %1504 = vrot.lane.b32.xlu0 %v1492, 28
        %v1505 = vpop.permute.xlu0 %1504
        %1506 = vrot.lane.b32.xlu0 %v1493, 28
        %v1507 = vpop.permute.xlu0 %1506
        %1508 = vrot.lane.b32.xlu0 %v1494, 28
        %v1509 = vpop.permute.xlu0 %1508
        %1510 = vrot.lane.b32.xlu0 %v1495, 28
        %v1511 = vpop.permute.xlu0 %1510
        %v1512 = vsel %vm497, %v1503, %v1505
        %v1513 = vsel %vm497, %v1505, %v1507
        %v1514 = vsel %vm497, %v1507, %v1509
        %v1515 = vsel %vm497, %v1509, %v1511
        %v1521 = vadd.f32 %v1490, %v1503
        %v1522 = vadd.f32 %v1491, %v1512
        %v1523 = vadd.f32 %v1492, %v1513
        %v1524 = vadd.f32 %v1493, %v1514
        %v1525 = vadd.f32 %v1494, %v1515
        %1527 = vrot.lane.b32.xlu0 %v1492, 56
        %v1528 = vpop.permute.xlu0 %1527
        %1529 = vrot.lane.b32.xlu0 %v1493, 56
        %v1530 = vpop.permute.xlu0 %1529
        %1531 = vrot.lane.b32.xlu0 %v1494, 56
        %v1532 = vpop.permute.xlu0 %1531
        %1533 = vrot.lane.b32.xlu0 %v1495, 56
        %v1534 = vpop.permute.xlu0 %1533
        %1535 = vrot.lane.b32.xlu0 %v1496, 56
        %v1536 = vpop.permute.xlu0 %1535
        %v1537 = vsel %vm705, %v1528, %v1530
        %v1538 = vsel %vm705, %v1530, %v1532
        %v1539 = vsel %vm705, %v1532, %v1534
        %v1540 = vsel %vm705, %v1534, %v1536
        %v1546 = vadd.f32 %v1521, %v1528
        %v1547 = vadd.f32 %v1522, %v1537
        %v1548 = vadd.f32 %v1523, %v1538
        %v1549 = vadd.f32 %v1524, %v1539
        %v1550 = vadd.f32 %v1525, %v1540
        %v1551 = vld [vmem:[%s280] ss:$8 sm:$0xf]
        %s1552 = scalar_lea.vmem %s280, 1 [#allocation3]
        %v1553 = vld [vmem:[%s1552] ss:$8 sm:$0xf]
        %v1554 = vld [vmem:[%s280 + $0x20] sm:$0xff]
        %v1555 = vld [vmem:[%s280 + $0x28] sm:$0xff]
        %v1556 = vld [vmem:[%s280 + $0x30] sm:$0xff]
        %v1557 = vld [vmem:[%s280 + $0x38] sm:$0xff]
        %v1558 = vld [vmem:[%s280 + $0x40] sm:$0xff]
        %v1559 = vld [vmem:[%s280 + $0x48] sm:$0xff]
        %v1560 = vld [vmem:[%s280 + $0x50] sm:$0xff]
        %v1561 = vld [vmem:[%s280 + $0x58] sm:$0xff]
        %v1563 = vlaneseq
        %v1564 = vshrl.u32 %v1563, 7
        %v1565 = vsub.s32 0, %v1564
        %v1566 = vrot.slane %v1551, %v1565
        %v1567 = vlaneseq
        %v1568 = vshrl.u32 %v1567, 7
        %v1569 = vsub.s32 1, %v1568
        %v1570 = vrot.slane %v1551, %v1569
        %v1571 = vlaneseq
        %v1572 = vshrl.u32 %v1571, 7
        %v1573 = vsub.s32 2, %v1572
        %v1574 = vrot.slane %v1551, %v1573
        %v1575 = vlaneseq
        %v1576 = vshrl.u32 %v1575, 7
        %v1577 = vsub.s32 3, %v1576
        %v1578 = vrot.slane %v1551, %v1577
        %v1583 = vmul.f32 %v1210, %v1566
        %v1584 = vmul.f32 %v1212, %v1570
        %v1585 = vmul.f32 %v1287, %v1574
        %v1586 = vmul.f32 %v1289, %v1578
        %1587 = vrot.lane.b32.xlu0 %v1566, 89
        %v1588 = vpop.permute.xlu0 %1587
        %1589 = vrot.lane.b32.xlu0 %v1570, 89
        %v1590 = vpop.permute.xlu0 %1589
        %1591 = vrot.lane.b32.xlu0 %v1574, 89
        %v1592 = vpop.permute.xlu0 %1591
        %1593 = vrot.lane.b32.xlu0 %v1578, 89
        %v1594 = vpop.permute.xlu0 %1593
        %vm1595 = vcmask 728064
        %v1596 = vsel %vm1595, %v1588, %v1590
        %v1597 = vsel %vm1595, %v1590, %v1592
        %v1598 = vsel %vm1595, %v1592, %v1594
        %v1604 = vmul.f32 %v1546, %v1588
        %v1605 = vmul.f32 %v1547, %v1596
        %v1606 = vmul.f32 %v1548, %v1597
        %v1607 = vmul.f32 %v1549, %v1598
        %v1608 = vmul.f32 %v1550, %v1594
        %v1609 = vmul.f32 %v1583, %v1583
        %v1610 = vmul.f32 %v1584, %v1584
        %v1611 = vmul.f32 %v1585, %v1585
        %v1612 = vmul.f32 %v1586, %v1586
        %1617 = vrot.lane.b32.xlu0 %v1609, 89
        %v1618 = vpop.permute.xlu0 %1617
        %1619 = vrot.lane.b32.xlu0 %v1610, 89
        %v1620 = vpop.permute.xlu0 %1619
        %1621 = vrot.lane.b32.xlu0 %v1611, 89
        %v1622 = vpop.permute.xlu0 %1621
        %1623 = vrot.lane.b32.xlu0 %v1612, 89
        %v1624 = vpop.permute.xlu0 %1623
        %v1625 = vsel %vm1595, %v1618, %v1620
        %v1626 = vsel %vm1595, %v1620, %v1622
        %v1627 = vsel %vm1595, %v1622, %v1624
        %v1633 = vsub.f32 %v1604, %v1618
        %v1634 = vsub.f32 %v1605, %v1625
        %v1635 = vsub.f32 %v1606, %v1626
        %v1636 = vsub.f32 %v1607, %v1627
        %v1637 = vsub.f32 %v1608, %v1624
        %v1638 = vmax.f32 %v1633, 0.0
        %v1639 = vmax.f32 %v1634, 0.0
        %v1640 = vmax.f32 %v1635, 0.0
        %v1641 = vmax.f32 %v1636, 0.0
        %v1642 = vmax.f32 %v1637, 0.0
        %v1643 = vadd.f32 %v1638, 1e-05
        %v1644 = vadd.f32 %v1639, 1e-05
        %v1645 = vadd.f32 %v1640, 1e-05
        %v1646 = vadd.f32 %v1641, 1e-05
        %v1647 = vadd.f32 %v1642, 1e-05
        %v1648 = vrsqrt.pop %v1643
        %v1649 = vrsqrt.pop %v1644
        %v1650 = vrsqrt.pop %v1645
        %v1651 = vrsqrt.pop %v1646
        %v1652 = vrsqrt.pop %v1647
        %v1654 = vlaneseq
        %v1655 = vshrl.u32 %v1654, 7
        %v1656 = vsub.s32 0, %v1655
        %v1657 = vrot.slane %v1553, %v1656
        %v1658 = vlaneseq
        %v1659 = vshrl.u32 %v1658, 7
        %v1660 = vsub.s32 1, %v1659
        %v1661 = vrot.slane %v1553, %v1660
        %v1662 = vlaneseq
        %v1663 = vshrl.u32 %v1662, 7
        %v1664 = vsub.s32 2, %v1663
        %v1665 = vrot.slane %v1553, %v1664
        %v1666 = vlaneseq
        %v1667 = vshrl.u32 %v1666, 7
        %v1668 = vsub.s32 3, %v1667
        %v1669 = vrot.slane %v1553, %v1668
        %1670 = vrot.lane.b32.xlu0 %v1657, 89
        %v1671 = vpop.permute.xlu0 %1670
        %1672 = vrot.lane.b32.xlu0 %v1661, 89
        %v1673 = vpop.permute.xlu0 %1672
        %1674 = vrot.lane.b32.xlu0 %v1665, 89
        %v1675 = vpop.permute.xlu0 %1674
        %1676 = vrot.lane.b32.xlu0 %v1669, 89
        %v1677 = vpop.permute.xlu0 %1676
        %v1678 = vsel %vm1595, %v1671, %v1673
        %v1679 = vsel %vm1595, %v1673, %v1675
        %v1680 = vsel %vm1595, %v1675, %v1677
        %v1686 = vmul.f32 %v1648, %v1671
        %v1687 = vmul.f32 %v1649, %v1678
        %v1688 = vmul.f32 %v1650, %v1679
        %v1689 = vmul.f32 %v1651, %v1680
        %v1690 = vmul.f32 %v1652, %v1677
        %v1691 = vlaneseq
        %v1692 = vshrl.u32 %v1691, 7
        %v1693 = vsub.s32 0, %v1692
        %v1694 = vrot.slane %v1583, %v1693
        %v1695 = vlaneseq
        %v1696 = vshrl.u32 %v1695, 7
        %v1697 = vsub.s32 0, %v1696
        %v1698 = vrot.slane %v1584, %v1697
        %v1699 = vlaneseq
        %v1700 = vshrl.u32 %v1699, 7
        %v1701 = vsub.s32 0, %v1700
        %v1702 = vrot.slane %v1585, %v1701
        %v1703 = vlaneseq
        %v1704 = vshrl.u32 %v1703, 7
        %v1705 = vsub.s32 0, %v1704
        %v1706 = vrot.slane %v1586, %v1705
        %v1707 = vmul.f32 %v1554, %v1694
        %v1708 = vmul.f32 %v1555, %v1698
        %v1709 = vmul.f32 %v1556, %v1702
        %v1710 = vmul.f32 %v1557, %v1706
        %v1711 = vsub.f32 %v1204, %v1707
        %v1712 = vsub.f32 %v1206, %v1708
        %v1713 = vsub.f32 %v1281, %v1709
        %v1714 = vsub.f32 %v1283, %v1710
        %v1715 = vlaneseq
        %v1716 = vshrl.u32 %v1715, 7
        %v1717 = vsub.s32 0, %v1716
        %v1718 = vrot.slane %v1686, %v1717
        %v1719 = vlaneseq
        %v1720 = vshrl.u32 %v1719, 7
        %v1721 = vsub.s32 0, %v1720
        %v1722 = vrot.slane %v1687, %v1721
        %v1723 = vlaneseq
        %v1724 = vshrl.u32 %v1723, 7
        %v1725 = vsub.s32 0, %v1724
        %v1726 = vrot.slane %v1688, %v1725
        %v1727 = vlaneseq
        %v1728 = vshrl.u32 %v1727, 7
        %v1729 = vsub.s32 0, %v1728
        %v1730 = vrot.slane %v1689, %v1729
        %v1731 = vlaneseq
        %v1732 = vshrl.u32 %v1731, 7
        %v1733 = vsub.s32 0, %v1732
        %v1734 = vrot.slane %v1690, %v1733
        %1740 = vrot.lane.b32.xlu0 %v1718, 39
        %v1741 = vpop.permute.xlu0 %1740
        %1742 = vrot.lane.b32.xlu0 %v1722, 39
        %v1743 = vpop.permute.xlu0 %1742
        %1744 = vrot.lane.b32.xlu0 %v1726, 39
        %v1745 = vpop.permute.xlu0 %1744
        %1746 = vrot.lane.b32.xlu0 %v1730, 39
        %v1747 = vpop.permute.xlu0 %1746
        %1748 = vrot.lane.b32.xlu0 %v1734, 39
        %v1749 = vpop.permute.xlu0 %1748
        %v1750 = vsel %vm405, %v1741, %v1743
        %v1751 = vsel %vm405, %v1743, %v1745
        %v1752 = vsel %vm405, %v1745, %v1747
        %v1753 = vsel %vm405, %v1747, %v1749
        %v1758 = vmul.f32 %v1711, %v1750
        %v1759 = vmul.f32 %v1712, %v1751
        %v1760 = vmul.f32 %v1713, %v1752
        %v1761 = vmul.f32 %v1714, %v1753
        %v1762 = vadd.f32 %v1758, %v1558
        %v1763 = vadd.f32 %v1759, %v1559
        %v1764 = vadd.f32 %v1760, %v1560
        %v1765 = vadd.f32 %v1761, %v1561
        %1766 = vst [vmem:[%s381] sm:$0xff] %v1762
        %1767 = vst [vmem:[%s381 + $0x8] sm:$0xff] %v1763
        %1768 = vst [vmem:[%s381 + $0x10] sm:$0xff] %v1764
        %1769 = vst [vmem:[%s381 + $0x18] sm:$0xff] %v1765
        %s1770 = smul.u32 4, %s20
        %p1771 = scmp.lt.s32.totalorder %s19, 1
        %s1772 = scalar_select %p1771, %s19, 1
        %p1773 = scmp.lt.s32.totalorder %s1770, 7
        %s1774 = scalar_select %p1773, %s1770, 7
        %s1775 = smul.addr %s1772, 8
        %s1776 = sadd.s32 %s1774, %s1775
        %s1777 = smul.addr %s1776, 8
        %s1778 = scalar_lea.vmem %s4, %s1777
        // Predicated region
        $region60: #{nhn_conv3d.1} parent=54 // pred_check
          %p1779 = pneg %p152
        $region61: #{nhn_conv3d.1} parent=54 // pred_check_branch
          %1781 = sbr.rel (%p1779) target = $region63
        $region62: #{nhn_conv3d.1} parent=54 // pred_region
          %s1782 = smul.u32 4, %s20
        $region63: #{nhn_conv3d.1} parent=54 // pred_fallthru
          _
      $region55: #{nhn_conv3d.1} parent=5 // pred_fallthru
        _
      %p1783 = scmp.le.s32.totalorder 2, %s10
      // Predicated region
      $region64: #{nhn_conv3d.1} parent=5 // pred_check
        %p1784 = pneg %p1783
      $region65: #{nhn_conv3d.1} parent=5 // pred_check_branch
        %1786 = sbr.rel (%p1784) target = $region67
      $region66: #{nhn_conv3d.1} parent=5 // pred_region
        %s1787 = ssub.s32 %s10, 2
        // Predicated region
        $region68: #{nhn_conv3d.1} parent=66 // pred_check
          %p1788 = pneg %p158
        $region69: #{nhn_conv3d.1} parent=66 // pred_check_branch
          %1790 = sbr.rel (%p1788) target = $region71
        $region70: #{nhn_conv3d.1} parent=66 // pred_region
          %s1791 = smul.u32 4, %s22
          %p1792 = scmp.lt.s32.totalorder %s21, 1
          %s1793 = scalar_select %p1792, %s21, 1
          %p1794 = scmp.lt.s32.totalorder %s1791, 7
          %s1795 = scalar_select %p1794, %s1791, 7
          %s1796 = smul.addr %s1793, 8
          %s1797 = sadd.s32 %s1795, %s1796
          %s1798 = smul.addr %s1797, 8
          %s1799 = scalar_lea.vmem %s4, %s1798
        $region71: #{nhn_conv3d.1} parent=66 // pred_fallthru
          _
      $region67: #{nhn_conv3d.1} parent=5 // pred_fallthru
        _
    $region6: #{nhn_conv3d.1} parent=1 // loop_footer
      %s14 = sadd.s32 1, %s10
    $region7: #{nhn_conv3d.1} parent=1 // loop_footer_branch
      %9 = sbr.rel target = $region3
    $region8: #{nhn_conv3d.1} parent=1 // loop_exit
      _

</llo_original>
